<compile_context>
chip_gen: v5e
topology: v5e:2x2
jax: 0.10.0
libtpu: 0.0.40
codegen_flags: <defaults>
</compile_context>

<pallas_src>
import jax
import jax.numpy as jnp
from jax import lax
from jax.experimental import pallas as pl
from jax.experimental.pallas import tpu as pltpu

# ---- fixed architecture constants from BackBoneNet_s_shallow ----
K1 = 20          # conv1 kernel width (1, 20)
C1 = 10          # conv1 out channels
C2 = 20          # conv2 out channels (kernel (ch, 1), no bias)
P2, S2 = 20, 8   # AvgPool2d (1, 20), stride (1, 8)
K3, S3 = 4, 8    # conv3 kernel (1, 4), stride (1, 8)
C3 = 10          # conv3 out channels
BN_EPS = 1e-5
LANE = 128
W3P = 128        # lane-dense width for the fused pool+conv3 stage and the output store


def _round_up(x, m):
    return ((x + m - 1) // m) * m


# ----------------------------- Pallas kernel -----------------------------
def _slc_kernel(x_ref, w_ref, b_ref, p2f_ref, w3_ref, b3_ref, o_ref):
    """One region per grid step.  Forward = 3 canonical batched MXU matmuls + bias/ReLU."""
    B = x_ref.shape[1]
    T1P = p2f_ref.shape[0]

    x = x_ref[0]                                                   # (B, CHP, TP) bf16

    # im2col: K1 shifted lane slices concatenated along the 16-aligned channel axis.
    cols = jnp.concatenate([x[:, :, k:k + T1P] for k in range(K1)], axis=1)   # (B, F, T1P)

    # conv1 ∘ conv2 ∘ BN-scale folded into one (C2, F) weight; batch handled by the
    # batched matmul, NOT by a block-diagonal weight.
    w_b = jnp.broadcast_to(w_ref[0], (B,) + w_ref.shape[1:])                  # (B, C2, F)
    y = jnp.einsum("bqf,bft->bqt", w_b, cols, preferred_element_type=jnp.float32)
    y = jnp.maximum(y + b_ref[0][None], 0.0)                                  # (B, C2, T1P) f32

    # TODO(synk): F.dropout(x, p) is training-mode stochastic dropout; identity here (inference).

    # AvgPool2d(1,20)/(1,8) fused with conv3's window selection: one batched matmul.
    # p2f[t, k*W3P + w] = 1/20 iff t lies in the pool window feeding conv3 tap k, output w.
    p2f_b = jnp.broadcast_to(p2f_ref[...], (B,) + p2f_ref.shape)              # (B, T1P, K3*W3P)
    z = jnp.einsum("bqt,btm->bqm", y.astype(p2f_ref.dtype), p2f_b,
                   preferred_element_type=jnp.float32)                        # (B, C2, K3*W3P)

    # conv3 channel mixing + bias: K3 small batched matmuls on 128-aligned lane slices.
    acc = jnp.zeros((B, C3, W3P), jnp.float32)
    for k in range(K3):
        w3k = jnp.broadcast_to(w3_ref[0, k], (B, C3, w3_ref.shape[3]))        # (B, C3, C2)
        zk = z[:, :, k * W3P:(k + 1) * W3P]                                   # (B, C2, W3P)
        acc = acc + jnp.einsum("bjq,bqw->bjw", w3k, zk,
                               preferred_element_type=jnp.float32)
    o_ref[0] = acc + b3_ref[0][None]                                          # (B, C3, W3P)


# --------------------- host-side parameter folding ----------------------
def _prep_region(p, ch, chp):
    """Fold conv1+conv2+BN into one (C2, K1*chp) weight + bias; repack conv3."""
    w1 = p["conv1_w"].reshape(C1, K1)                           # (C1, K1)
    b1 = p["conv1_b"]                                           # (C1,)
    w2 = p["conv2_w"][:, :, :, 0]                               # (C2, C1, ch)
    scale = p["bn2_gamma"] * lax.rsqrt(p["bn2_var"] + BN_EPS)   # (C2,)
    shift = p["bn2_beta"] - p["bn2_mean"] * scale

    wf = jnp.einsum("qoc,ok->qkc", w2, w1)                      # (C2, K1, ch)
    wf = jnp.pad(wf, ((0, 0), (0, 0), (0, chp - ch)))           # (C2, K1, CHP)
    wf = (scale[:, None, None] * wf).reshape(C2, K1 * chp)      # (C2, F)
    bias = scale * jnp.einsum("qoc,o->q", w2, b1) + shift       # (C2,)

    w3 = jnp.transpose(p["conv3_w"][:, :, 0, :], (2, 0, 1))     # (K3, C3, C2)
    b3 = p["conv3_b"][:, None]                                  # (C3, 1)
    return wf, bias[:, None], w3, b3


def init_backbone_params(key, ch):
    ks = jax.random.split(key, 9)
    rnd = lambda k, shape, s=0.1: s * jax.random.normal(k, shape, jnp.float32)
    return {
        "conv1_w": rnd(ks[0], (C1, 1, 1, K1)),
        "conv1_b": rnd(ks[1], (C1,)),
        "conv2_w": rnd(ks[2], (C2, C1, ch, 1)),
        "bn2_gamma": 1.0 + rnd(ks[3], (C2,)),
        "bn2_beta": rnd(ks[4], (C2,)),
        "bn2_mean": rnd(ks[5], (C2,)),
        "bn2_var": jnp.abs(rnd(ks[6], (C2,))) + 1.0,
        "conv3_w": rnd(ks[7], (C3, C2, 1, K3)),
        "conv3_b": rnd(ks[8], (C3,)),
    }


# ------------------------------ forward ---------------------------------
def spatial_local_conv_forward(x, division, params_per_region):
    """Returns a list of (B, 1, feat) arrays, one per region (matches PyTorch)."""
    B, _, T = x.shape
    T1 = T - K1 + 1
    W2 = (T1 - P2) // S2 + 1
    W3 = (W2 - K3) // S3 + 1
    T1P = _round_up(T1, LANE)                   # lane-dense conv1 output width
    TP = T1P + LANE                             # headroom for the K1-1 lane shifts
    MM = K3 * W3P

    keys = list(division.keys())
    R = len(keys)
    CHP = _round_up(max(len(division[i]) for i in keys), 16)   # bf16 sublane-tile aligned
    F = K1 * CHP

    xs, ws, bs, w3s, b3s = [], [], [], [], []
    for i in keys:
        ch = len(division[i])
        region = jnp.take(x, jnp.asarray(division[i], dtype=jnp.int32), axis=1)   # (B, ch, T)
        region = jnp.pad(region, ((0, 0), (0, CHP - ch), (0, TP - T)))
        xs.append(region)
        wf, bias, w3, b3 = _prep_region(params_per_region[i], ch, CHP)
        ws.append(wf); bs.append(bias); w3s.append(w3); b3s.append(b3)

    x_all = jnp.stack(xs).astype(jnp.bfloat16)                  # (R, B, CHP, TP)
    w_all = jnp.stack(ws).astype(jnp.bfloat16)                  # (R, C2, F)
    b_all = jnp.stack(bs).astype(jnp.float32)                   # (R, C2, 1)
    w3_all = jnp.stack(w3s).astype(jnp.float32)                 # (R, K3, C3, C2)
    b3_all = jnp.stack(b3s).astype(jnp.float32)                 # (R, C3, 1)

    # fused AvgPool(1,20)/(1,8) + conv3 window-select matrix, shared by all regions;
    # zero outside [0, T1) and for padded w >= W3, so padded lanes never contribute.
    t_idx = jnp.arange(T1P)[:, None, None]
    k_idx = jnp.arange(K3)[None, :, None]
    w_idx = jnp.arange(W3P)[None, None, :]
    pos = (w_idx * S3 + k_idx) * S2
    valid = (w_idx < W3) & (t_idx < T1) & (t_idx >= pos) & (t_idx < pos + P2)
    p2f = jnp.where(valid, 1.0 / P2, 0.0).reshape(T1P, MM).astype(jnp.bfloat16)

    out = pl.pallas_call(
        _slc_kernel,
        out_shape=jax.ShapeDtypeStruct((R, B, C3, W3P), jnp.float32),
        grid=(R,),
        in_specs=[
            pl.BlockSpec((1, B, CHP, TP), lambda r: (r, 0, 0, 0)),
            pl.BlockSpec((1, C2, F), lambda r: (r, 0, 0)),
            pl.BlockSpec((1, C2, 1), lambda r: (r, 0, 0)),
            pl.BlockSpec((T1P, MM), lambda r: (0, 0)),
            pl.BlockSpec((1, K3, C3, C2), lambda r: (r, 0, 0, 0)),
            pl.BlockSpec((1, C3, 1), lambda r: (r, 0, 0)),
        ],
        out_specs=pl.BlockSpec((1, B, C3, W3P), lambda r: (r, 0, 0, 0)),
        compiler_params=pltpu.CompilerParams(dimension_semantics=("parallel",)),
    )(x_all, w_all, b_all, p2f, w3_all, b3_all)

    # slice away lane padding, channel-major flatten (PyTorch reshape order), unsqueeze(1)
    return [out[n, :, :, :W3].reshape(B, C3 * W3)[:, None, :] for n in range(R)]


# ------------------------- pure-JAX reference -------------------------
def ref_region(x_region, p):
    B = x_region.shape[0]
    dn = ("NCHW", "OIHW", "NCHW")
    y = x_region[:, None, :, :]
    y = lax.conv_general_dilated(y, p["conv1_w"], (1, 1), "VALID", dimension_numbers=dn)
    y = y + p["conv1_b"].reshape(1, C1, 1, 1)
    y = lax.conv_general_dilated(y, p["conv2_w"], (1, 1), "VALID", dimension_numbers=dn)
    scale = p["bn2_gamma"] / jnp.sqrt(p["bn2_var"] + BN_EPS)
    shift = p["bn2_beta"] - p["bn2_mean"] * scale
    y = y * scale.reshape(1, C2, 1, 1) + shift.reshape(1, C2, 1, 1)
    y = jnp.maximum(y, 0.0)
    y = lax.reduce_window(y, 0.0, lax.add, (1, 1, 1, P2), (1, 1, 1, S2), "VALID") / P2
    y = lax.conv_general_dilated(y, p["conv3_w"], (1, S3), "VALID", dimension_numbers=dn)
    y = y + p["conv3_b"].reshape(1, C3, 1, 1)
    return y.reshape(B, -1)


if __name__ == "__main__":
    B, NCH, T = 2, 8, 127
    division = {0: [0, 1, 2], 1: [3, 4, 5, 6]}

    key = jax.random.PRNGKey(0)
    kx, kp = jax.random.split(key)
    x = jax.random.normal(kx, (B, NCH, T), jnp.float32)
    pkeys = jax.random.split(kp, len(division))
    params = {i: init_backbone_params(pkeys[n], len(division[i]))
              for n, i in enumerate(division)}

    outs = spatial_local_conv_forward(x, division, params)
    outs = [jax.block_until_ready(o) for o in outs]

    # sanity check against pure-JAX f32 reference (kernel streams x/weights in bf16)
    for n, i in enumerate(division):
        region = jnp.take(x, jnp.asarray(division[i], dtype=jnp.int32), axis=1)
        ref = ref_region(region, params[i])
        got = outs[n]
        assert got.shape == (B, 1, ref.shape[1]), (got.shape, ref.shape)
        err = float(jnp.max(jnp.abs(got[:, 0, :] - ref)))
        assert err < 3e-2, f"region {i}: max abs err {err}"

    print("KERNEL_OK")
</pallas_src>

<mosaic_0001>
module attributes {stable_mosaic.version = 11 : i64} {
  func.func @_slc_kernel(%arg0: i32, %arg1: memref<1x2x16x256xbf16, #tpu.memory_space<vmem>>, %arg2: memref<1x20x320xbf16, #tpu.memory_space<vmem>>, %arg3: memref<1x20x1xf32, #tpu.memory_space<vmem>>, %arg4: memref<128x512xbf16, #tpu.memory_space<vmem>>, %arg5: memref<1x4x10x20xf32, #tpu.memory_space<vmem>>, %arg6: memref<1x10x1xf32, #tpu.memory_space<vmem>>, %arg7: memref<1x2x10x128xf32, #tpu.memory_space<vmem>>) attributes {dimension_semantics = [#tpu.dimension_semantics<parallel>], iteration_bounds = array<i64: 2>, scalar_prefetch = 0 : i64, scratch_operands = 0 : i64, tpu.core_type = #tpu.core_type<tc>, window_params = [{transform_indices = @transform_0, window_bounds = array<i64: 1, 2, 16, 256>}, {transform_indices = @transform_1, window_bounds = array<i64: 1, 20, 320>}, {transform_indices = @transform_2, window_bounds = array<i64: 1, 20, 1>}, {pipeline_mode = #tpu.pipeline_mode<synchronous>, transform_indices = @transform_3, window_bounds = array<i64: 128, 512>}, {transform_indices = @transform_4, window_bounds = array<i64: 1, 4, 10, 20>}, {transform_indices = @transform_5, window_bounds = array<i64: 1, 10, 1>}, {transform_indices = @transform_6, window_bounds = array<i64: 1, 2, 10, 128>}]} {
    %c0 = arith.constant 0 : index
    %c0_0 = arith.constant 0 : index
    %c0_1 = arith.constant 0 : index
    %c0_2 = arith.constant 0 : index
    %0 = vector.load %arg1[%c0, %c0_0, %c0_1, %c0_2] : memref<1x2x16x256xbf16, #tpu.memory_space<vmem>>, vector<1x2x16x256xbf16>
    %1 = vector.shape_cast %0 : vector<1x2x16x256xbf16> to vector<2x16x256xbf16>
    %2 = vector.extract_strided_slice %1 {offsets = [0, 0, 0], sizes = [2, 16, 128], strides = [1, 1, 1]} : vector<2x16x256xbf16> to vector<2x16x128xbf16>
    %3 = vector.extract_strided_slice %1 {offsets = [0, 0, 1], sizes = [2, 16, 128], strides = [1, 1, 1]} : vector<2x16x256xbf16> to vector<2x16x128xbf16>
    %4 = vector.extract_strided_slice %1 {offsets = [0, 0, 2], sizes = [2, 16, 128], strides = [1, 1, 1]} : vector<2x16x256xbf16> to vector<2x16x128xbf16>
    %5 = vector.extract_strided_slice %1 {offsets = [0, 0, 3], sizes = [2, 16, 128], strides = [1, 1, 1]} : vector<2x16x256xbf16> to vector<2x16x128xbf16>
    %6 = vector.extract_strided_slice %1 {offsets = [0, 0, 4], sizes = [2, 16, 128], strides = [1, 1, 1]} : vector<2x16x256xbf16> to vector<2x16x128xbf16>
    %7 = vector.extract_strided_slice %1 {offsets = [0, 0, 5], sizes = [2, 16, 128], strides = [1, 1, 1]} : vector<2x16x256xbf16> to vector<2x16x128xbf16>
    %8 = vector.extract_strided_slice %1 {offsets = [0, 0, 6], sizes = [2, 16, 128], strides = [1, 1, 1]} : vector<2x16x256xbf16> to vector<2x16x128xbf16>
    %9 = vector.extract_strided_slice %1 {offsets = [0, 0, 7], sizes = [2, 16, 128], strides = [1, 1, 1]} : vector<2x16x256xbf16> to vector<2x16x128xbf16>
    %10 = vector.extract_strided_slice %1 {offsets = [0, 0, 8], sizes = [2, 16, 128], strides = [1, 1, 1]} : vector<2x16x256xbf16> to vector<2x16x128xbf16>
    %11 = vector.extract_strided_slice %1 {offsets = [0, 0, 9], sizes = [2, 16, 128], strides = [1, 1, 1]} : vector<2x16x256xbf16> to vector<2x16x128xbf16>
    %12 = vector.extract_strided_slice %1 {offsets = [0, 0, 10], sizes = [2, 16, 128], strides = [1, 1, 1]} : vector<2x16x256xbf16> to vector<2x16x128xbf16>
    %13 = vector.extract_strided_slice %1 {offsets = [0, 0, 11], sizes = [2, 16, 128], strides = [1, 1, 1]} : vector<2x16x256xbf16> to vector<2x16x128xbf16>
    %14 = vector.extract_strided_slice %1 {offsets = [0, 0, 12], sizes = [2, 16, 128], strides = [1, 1, 1]} : vector<2x16x256xbf16> to vector<2x16x128xbf16>
    %15 = vector.extract_strided_slice %1 {offsets = [0, 0, 13], sizes = [2, 16, 128], strides = [1, 1, 1]} : vector<2x16x256xbf16> to vector<2x16x128xbf16>
    %16 = vector.extract_strided_slice %1 {offsets = [0, 0, 14], sizes = [2, 16, 128], strides = [1, 1, 1]} : vector<2x16x256xbf16> to vector<2x16x128xbf16>
    %17 = vector.extract_strided_slice %1 {offsets = [0, 0, 15], sizes = [2, 16, 128], strides = [1, 1, 1]} : vector<2x16x256xbf16> to vector<2x16x128xbf16>
    %18 = vector.extract_strided_slice %1 {offsets = [0, 0, 16], sizes = [2, 16, 128], strides = [1, 1, 1]} : vector<2x16x256xbf16> to vector<2x16x128xbf16>
    %19 = vector.extract_strided_slice %1 {offsets = [0, 0, 17], sizes = [2, 16, 128], strides = [1, 1, 1]} : vector<2x16x256xbf16> to vector<2x16x128xbf16>
    %20 = vector.extract_strided_slice %1 {offsets = [0, 0, 18], sizes = [2, 16, 128], strides = [1, 1, 1]} : vector<2x16x256xbf16> to vector<2x16x128xbf16>
    %21 = vector.extract_strided_slice %1 {offsets = [0, 0, 19], sizes = [2, 16, 128], strides = [1, 1, 1]} : vector<2x16x256xbf16> to vector<2x16x128xbf16>
    %22 = tpu.concatenate %2, %3, %4, %5, %6, %7, %8, %9, %10, %11, %12, %13, %14, %15, %16, %17 in 1 : vector<2x16x128xbf16>, vector<2x16x128xbf16>, vector<2x16x128xbf16>, vector<2x16x128xbf16>, vector<2x16x128xbf16>, vector<2x16x128xbf16>, vector<2x16x128xbf16>, vector<2x16x128xbf16>, vector<2x16x128xbf16>, vector<2x16x128xbf16>, vector<2x16x128xbf16>, vector<2x16x128xbf16>, vector<2x16x128xbf16>, vector<2x16x128xbf16>, vector<2x16x128xbf16>, vector<2x16x128xbf16> -> vector<2x256x128xbf16>
    %23 = tpu.concatenate %18, %19, %20, %21 in 1 : vector<2x16x128xbf16>, vector<2x16x128xbf16>, vector<2x16x128xbf16>, vector<2x16x128xbf16> -> vector<2x64x128xbf16>
    %24 = tpu.concatenate %22, %23 in 1 : vector<2x256x128xbf16>, vector<2x64x128xbf16> -> vector<2x320x128xbf16>
    %c0_3 = arith.constant 0 : index
    %c0_4 = arith.constant 0 : index
    %c0_5 = arith.constant 0 : index
    %25 = vector.load %arg2[%c0_3, %c0_4, %c0_5] : memref<1x20x320xbf16, #tpu.memory_space<vmem>>, vector<1x20x320xbf16>
    %26 = vector.shape_cast %25 : vector<1x20x320xbf16> to vector<20x320xbf16>
    %27 = vector.shape_cast %26 : vector<20x320xbf16> to vector<1x20x320xbf16>
    %28 = vector.broadcast %27 : vector<1x20x320xbf16> to vector<2x20x320xbf16>
    "tpu.trace_start"() <{level = 10 : i32, message = "bqf,bft->bqt"}> : () -> ()
    %cst = arith.constant dense<0.000000e+00> : vector<2x20x128xf32>
    %29 = tpu.matmul %28, %24, %cst {dimension_numbers = #tpu.dot_dimension_numbers<[2], [1], [1], [2], [0, 0, 0, 1, 1, 2], [0], [0]>} : vector<2x20x320xbf16>, vector<2x320x128xbf16>, vector<2x20x128xf32> -> vector<2x20x128xf32>
    "tpu.trace_stop"() : () -> ()
    %c0_6 = arith.constant 0 : index
    %c0_7 = arith.constant 0 : index
    %c0_8 = arith.constant 0 : index
    %30 = vector.load %arg3[%c0_6, %c0_7, %c0_8] : memref<1x20x1xf32, #tpu.memory_space<vmem>>, vector<1x20x1xf32>
    %31 = vector.shape_cast %30 : vector<1x20x1xf32> to vector<20x1xf32>
    %32 = vector.shape_cast %31 : vector<20x1xf32> to vector<1x20x1xf32>
    %33 = vector.broadcast %32 : vector<1x20x1xf32> to vector<2x20x128xf32>
    %34 = arith.addf %29, %33 : vector<2x20x128xf32>
    %cst_9 = arith.constant 0.000000e+00 : f32
    %35 = vector.broadcast %cst_9 : f32 to vector<2x20x128xf32>
    %36 = arith.maximumf %34, %35 : vector<2x20x128xf32>
    %c0_10 = arith.constant 0 : index
    %c0_11 = arith.constant 0 : index
    %37 = vector.load %arg4[%c0_10, %c0_11] : memref<128x512xbf16, #tpu.memory_space<vmem>>, vector<128x512xbf16>
    %38 = vector.shape_cast %37 : vector<128x512xbf16> to vector<1x128x512xbf16>
    %39 = vector.broadcast %38 : vector<1x128x512xbf16> to vector<2x128x512xbf16>
    %40 = arith.truncf %36 : vector<2x20x128xf32> to vector<2x20x128xbf16>
    "tpu.trace_start"() <{level = 10 : i32, message = "bqt,btm->bqm"}> : () -> ()
    %cst_12 = arith.constant dense<0.000000e+00> : vector<2x20x512xf32>
    %41 = tpu.matmul %40, %39, %cst_12 {dimension_numbers = #tpu.dot_dimension_numbers<[2], [1], [1], [2], [0, 0, 0, 1, 1, 2], [0], [0]>} : vector<2x20x128xbf16>, vector<2x128x512xbf16>, vector<2x20x512xf32> -> vector<2x20x512xf32>
    %cst_13 = arith.constant 0.000000e+00 : f32
    "tpu.trace_stop"() : () -> ()
    %42 = vector.broadcast %cst_13 : f32 to vector<2x10x128xf32>
    %c0_14 = arith.constant 0 : index
    %c0_15 = arith.constant 0 : index
    %c0_16 = arith.constant 0 : index
    %c0_17 = arith.constant 0 : index
    %43 = vector.load %arg5[%c0_14, %c0_15, %c0_16, %c0_17] : memref<1x4x10x20xf32, #tpu.memory_space<vmem>>, vector<1x1x10x20xf32>
    %44 = vector.shape_cast %43 : vector<1x1x10x20xf32> to vector<10x20xf32>
    %45 = vector.shape_cast %44 : vector<10x20xf32> to vector<1x10x20xf32>
    %46 = vector.broadcast %45 : vector<1x10x20xf32> to vector<2x10x20xf32>
    %47 = vector.extract_strided_slice %41 {offsets = [0, 0, 0], sizes = [2, 20, 128], strides = [1, 1, 1]} : vector<2x20x512xf32> to vector<2x20x128xf32>
    "tpu.trace_start"() <{level = 10 : i32, message = "bjq,bqw->bjw"}> : () -> ()
    %cst_18 = arith.constant dense<0.000000e+00> : vector<2x10x128xf32>
    %48 = tpu.matmul %46, %47, %cst_18 {dimension_numbers = #tpu.dot_dimension_numbers<[2], [1], [1], [2], [0, 0, 0, 1, 1, 2], [0], [0]>} : vector<2x10x20xf32>, vector<2x20x128xf32>, vector<2x10x128xf32> -> vector<2x10x128xf32>
    "tpu.trace_stop"() : () -> ()
    %49 = arith.addf %42, %48 : vector<2x10x128xf32>
    %c0_19 = arith.constant 0 : index
    %c1 = arith.constant 1 : index
    %c0_20 = arith.constant 0 : index
    %c0_21 = arith.constant 0 : index
    %50 = vector.load %arg5[%c0_19, %c1, %c0_20, %c0_21] : memref<1x4x10x20xf32, #tpu.memory_space<vmem>>, vector<1x1x10x20xf32>
    %51 = vector.shape_cast %50 : vector<1x1x10x20xf32> to vector<10x20xf32>
    %52 = vector.shape_cast %51 : vector<10x20xf32> to vector<1x10x20xf32>
    %53 = vector.broadcast %52 : vector<1x10x20xf32> to vector<2x10x20xf32>
    %54 = vector.extract_strided_slice %41 {offsets = [0, 0, 128], sizes = [2, 20, 128], strides = [1, 1, 1]} : vector<2x20x512xf32> to vector<2x20x128xf32>
    "tpu.trace_start"() <{level = 10 : i32, message = "bjq,bqw->bjw"}> : () -> ()
    %cst_22 = arith.constant dense<0.000000e+00> : vector<2x10x128xf32>
    %55 = tpu.matmul %53, %54, %cst_22 {dimension_numbers = #tpu.dot_dimension_numbers<[2], [1], [1], [2], [0, 0, 0, 1, 1, 2], [0], [0]>} : vector<2x10x20xf32>, vector<2x20x128xf32>, vector<2x10x128xf32> -> vector<2x10x128xf32>
    "tpu.trace_stop"() : () -> ()
    %56 = arith.addf %49, %55 : vector<2x10x128xf32>
    %c0_23 = arith.constant 0 : index
    %c2 = arith.constant 2 : index
    %c0_24 = arith.constant 0 : index
    %c0_25 = arith.constant 0 : index
    %57 = vector.load %arg5[%c0_23, %c2, %c0_24, %c0_25] : memref<1x4x10x20xf32, #tpu.memory_space<vmem>>, vector<1x1x10x20xf32>
    %58 = vector.shape_cast %57 : vector<1x1x10x20xf32> to vector<10x20xf32>
    %59 = vector.shape_cast %58 : vector<10x20xf32> to vector<1x10x20xf32>
    %60 = vector.broadcast %59 : vector<1x10x20xf32> to vector<2x10x20xf32>
    %61 = vector.extract_strided_slice %41 {offsets = [0, 0, 256], sizes = [2, 20, 128], strides = [1, 1, 1]} : vector<2x20x512xf32> to vector<2x20x128xf32>
    "tpu.trace_start"() <{level = 10 : i32, message = "bjq,bqw->bjw"}> : () -> ()
    %cst_26 = arith.constant dense<0.000000e+00> : vector<2x10x128xf32>
    %62 = tpu.matmul %60, %61, %cst_26 {dimension_numbers = #tpu.dot_dimension_numbers<[2], [1], [1], [2], [0, 0, 0, 1, 1, 2], [0], [0]>} : vector<2x10x20xf32>, vector<2x20x128xf32>, vector<2x10x128xf32> -> vector<2x10x128xf32>
    "tpu.trace_stop"() : () -> ()
    %63 = arith.addf %56, %62 : vector<2x10x128xf32>
    %c0_27 = arith.constant 0 : index
    %c3 = arith.constant 3 : index
    %c0_28 = arith.constant 0 : index
    %c0_29 = arith.constant 0 : index
    %64 = vector.load %arg5[%c0_27, %c3, %c0_28, %c0_29] : memref<1x4x10x20xf32, #tpu.memory_space<vmem>>, vector<1x1x10x20xf32>
    %65 = vector.shape_cast %64 : vector<1x1x10x20xf32> to vector<10x20xf32>
    %66 = vector.shape_cast %65 : vector<10x20xf32> to vector<1x10x20xf32>
    %67 = vector.broadcast %66 : vector<1x10x20xf32> to vector<2x10x20xf32>
    %68 = vector.extract_strided_slice %41 {offsets = [0, 0, 384], sizes = [2, 20, 128], strides = [1, 1, 1]} : vector<2x20x512xf32> to vector<2x20x128xf32>
    "tpu.trace_start"() <{level = 10 : i32, message = "bjq,bqw->bjw"}> : () -> ()
    %cst_30 = arith.constant dense<0.000000e+00> : vector<2x10x128xf32>
    %69 = tpu.matmul %67, %68, %cst_30 {dimension_numbers = #tpu.dot_dimension_numbers<[2], [1], [1], [2], [0, 0, 0, 1, 1, 2], [0], [0]>} : vector<2x10x20xf32>, vector<2x20x128xf32>, vector<2x10x128xf32> -> vector<2x10x128xf32>
    "tpu.trace_stop"() : () -> ()
    %70 = arith.addf %63, %69 : vector<2x10x128xf32>
    %c0_31 = arith.constant 0 : index
    %c0_32 = arith.constant 0 : index
    %c0_33 = arith.constant 0 : index
    %71 = vector.load %arg6[%c0_31, %c0_32, %c0_33] : memref<1x10x1xf32, #tpu.memory_space<vmem>>, vector<1x10x1xf32>
    %72 = vector.shape_cast %71 : vector<1x10x1xf32> to vector<10x1xf32>
    %73 = vector.shape_cast %72 : vector<10x1xf32> to vector<1x10x1xf32>
    %74 = vector.broadcast %73 : vector<1x10x1xf32> to vector<2x10x128xf32>
    %75 = arith.addf %70, %74 : vector<2x10x128xf32>
    %c0_34 = arith.constant 0 : index
    %c0_35 = arith.constant 0 : index
    %c0_36 = arith.constant 0 : index
    %c0_37 = arith.constant 0 : index
    %76 = vector.load %arg7[%c0_34, %c0_35, %c0_36, %c0_37] : memref<1x2x10x128xf32, #tpu.memory_space<vmem>>, vector<1x2x10x128xf32>
    %77 = vector.shape_cast %76 : vector<1x2x10x128xf32> to vector<2x10x128xf32>
    %78 = vector.shape_cast %75 : vector<2x10x128xf32> to vector<1x2x10x128xf32>
    tpu.vector_store %arg7[%c0_34, %c0_35, %c0_36, %c0_37], %78 {strides = array<i32>} : memref<1x2x10x128xf32, #tpu.memory_space<vmem>>, vector<1x2x10x128xf32>,
    return
  }
  func.func @transform_0(%arg0: i32) -> (i32, i32, i32, i32) {
    %c0_i32 = arith.constant 0 : i32
    %c0_i32_0 = arith.constant 0 : i32
    %c0_i32_1 = arith.constant 0 : i32
    %c0_i32_2 = arith.constant 0 : i32
    return %arg0, %c0_i32, %c0_i32_0, %c0_i32_1 : i32, i32, i32, i32
  }
  func.func @transform_1(%arg0: i32) -> (i32, i32, i32) {
    %c0_i32 = arith.constant 0 : i32
    %c0_i32_0 = arith.constant 0 : i32
    %c0_i32_1 = arith.constant 0 : i32
    return %arg0, %c0_i32, %c0_i32_0 : i32, i32, i32
  }
  func.func @transform_2(%arg0: i32) -> (i32, i32, i32) {
    %c0_i32 = arith.constant 0 : i32
    %c0_i32_0 = arith.constant 0 : i32
    %c0_i32_1 = arith.constant 0 : i32
    return %arg0, %c0_i32, %c0_i32_0 : i32, i32, i32
  }
  func.func @transform_3(%arg0: i32) -> (i32, i32) {
    %c0_i32 = arith.constant 0 : i32
    %c0_i32_0 = arith.constant 0 : i32
    %c0_i32_1 = arith.constant 0 : i32
    return %c0_i32, %c0_i32_0 : i32, i32
  }
  func.func @transform_4(%arg0: i32) -> (i32, i32, i32, i32) {
    %c0_i32 = arith.constant 0 : i32
    %c0_i32_0 = arith.constant 0 : i32
    %c0_i32_1 = arith.constant 0 : i32
    %c0_i32_2 = arith.constant 0 : i32
    return %arg0, %c0_i32, %c0_i32_0, %c0_i32_1 : i32, i32, i32, i32
  }
  func.func @transform_5(%arg0: i32) -> (i32, i32, i32) {
    %c0_i32 = arith.constant 0 : i32
    %c0_i32_0 = arith.constant 0 : i32
    %c0_i32_1 = arith.constant 0 : i32
    return %arg0, %c0_i32, %c0_i32_0 : i32, i32, i32
  }
  func.func @transform_6(%arg0: i32) -> (i32, i32, i32, i32) {
    %c0_i32 = arith.constant 0 : i32
    %c0_i32_0 = arith.constant 0 : i32
    %c0_i32_1 = arith.constant 0 : i32
    %c0_i32_2 = arith.constant 0 : i32
    return %arg0, %c0_i32, %c0_i32_0, %c0_i32_1 : i32, i32, i32, i32
  }
}

</mosaic_0001>

<llo_original>
// kernel: tpu_custom_call.1
$region0: #{tpu_custom_call.1}
  #allocation0 [shape = 'u32[]', space=smem, size = 0x4, offset = 0x4, fixed_abs, tag = 'smem constant byte address 0x4 - core index']
  #allocation1 [shape = 'u32[72,128]{1,0:T(1,128)}', space=vmem, size = 0x9000, scoped, tag = 'internal scratch']
  %s0 = inlined_call_operand.hbm [shape: bf16[2,2,16,256], index: 0, kind: input, shape index: {}]
  %s1 = inlined_call_operand.vmem [shape: bf16[2,20,320], index: 1, kind: input, shape index: {}]
  %s2 = inlined_call_operand.vmem [shape: f32[2,20,1], index: 2, kind: input, shape index: {}]
  %s3 = inlined_call_operand.vmem [shape: bf16[128,512], index: 3, kind: input, shape index: {}]
  %s4 = inlined_call_operand.vmem [shape: f32[2,4,10,20], index: 4, kind: input, shape index: {}]
  %s5 = inlined_call_operand.vmem [shape: f32[2,10,1], index: 5, kind: input, shape index: {}]
  %s6 = inlined_call_operand.vmem [shape: f32[2,2,10,128], index: 6, kind: output, shape index: {}]
  %s7 = sld [smem:[#allocation0]]
  $region61: #{tpu_custom_call.1} parent=0
    _
  %s9 = ssub.s32 1, %s7
  %s10 = scalar_select 0, %s9, %s7
  $region1: #{tpu_custom_call.1} parent=0
    #allocation2 [shape = 'u8[32768]{0}', space=vmem, size = 0x8000, scoped, tag = 'input window, operand 0']
    #allocation3 [shape = 's32[2]{0}', space=sflag, size = 0x8, scoped, tag = 'scoped memory for tpu_custom_call.1']
    %11 = vsyncpa [#allocation3], 0
    %s12 = scalar_lea.sflag [#allocation3], 1
    %13 = vsyncpa %s12, 0
    loop: start=0, step=1, limit=4
    $region2: #{tpu_custom_call.1} parent=1 // loop_pre_header
      _
    $region3: #{tpu_custom_call.1} parent=1 // loop_header
      %s15 = sphi 0, %s19
      %p16 = scmp.ge.s32.totalorder %s15, 4
      %s25 = sphi 0, %s27
      %s28 = sphi 0, %s25
      %s29 = sphi 0, %s28
      %s45 = sphi 0, %s29
      %s51 = sphi 0, %s53
      %s54 = sphi 0, %s51
      %s55 = sphi 0, %s54
      %s71 = sphi 0, %s55
      %s77 = sphi 0, %s79
      %s80 = sphi 0, %s77
      %s81 = sphi 0, %s80
      %s97 = sphi 0, %s81
      %s101 = sphi 0, %s101
      %s103 = sphi 0, %s101
      %s104 = sphi 0, %s103
      %s118 = sphi 0, %s104
      %s124 = sphi 0, %s126
      %s127 = sphi 0, %s124
      %s128 = sphi 0, %s127
      %s144 = sphi 0, %s128
      %s150 = sphi 0, %s152
      %s153 = sphi 0, %s150
      %s154 = sphi 0, %s153
      %s170 = sphi 0, %s154
      %s176 = sphi 0, %s178
      %s179 = sphi 0, %s176
      %s180 = sphi 0, %s179
      %s196 = sphi 0, %s180
    $region4: #{tpu_custom_call.1} parent=1 // loop_header_branch
      %18 = sbr.rel (%p16) target = $region8
    $region5: #{tpu_custom_call.1} parent=1 // loop_body
      %s20 = ssub.s32 %s15, 1
      %s21 = ssub.s32 %s15, 2
      %s22 = sadd.s32 %s15, 1
      %s23 = ssub.s32 %s15, %s22
      %p24 = scmp.eq.s32.totalorder %s23, 0
      %s26 = sadd.s32 %s25, 1
      %s27 = scalar_select %p24, %s25, %s26
      %p30 = pneg %p24
      %p31 = scmp.eq.s32.totalorder %s15, 1
      %p32 = por %p30, %p31
      %p33 = scmp.ne.s32.totalorder %s25, %s28
      %p34 = scmp.eq.s32.totalorder %s15, 0
      %p35 = por %p33, %p34
      %p36 = scmp.ne.s32.totalorder %s25, %s28
      %p37 = scmp.eq.s32.totalorder %s20, 1
      %p38 = por %p36, %p37
      %p39 = scmp.ne.s32.totalorder %s28, %s29
      %p40 = scmp.eq.s32.totalorder %s20, 0
      %p41 = por %p39, %p40
      %p42 = scmp.ne.s32.totalorder %s28, %s29
      %p43 = scmp.eq.s32.totalorder %s21, 1
      %p44 = por %p42, %p43
      %p46 = scmp.ne.s32.totalorder %s29, %s45
      %p47 = scmp.eq.s32.totalorder %s21, 0
      %p48 = por %p46, %p47
      %s49 = ssub.s32 %s15, %s22
      %p50 = scmp.eq.s32.totalorder %s49, 0
      %s52 = sadd.s32 %s51, 1
      %s53 = scalar_select %p50, %s51, %s52
      %p56 = pneg %p50
      %p57 = scmp.eq.s32.totalorder %s15, 1
      %p58 = por %p56, %p57
      %p59 = scmp.ne.s32.totalorder %s51, %s54
      %p60 = scmp.eq.s32.totalorder %s15, 0
      %p61 = por %p59, %p60
      %p62 = scmp.ne.s32.totalorder %s51, %s54
      %p63 = scmp.eq.s32.totalorder %s20, 1
      %p64 = por %p62, %p63
      %p65 = scmp.ne.s32.totalorder %s54, %s55
      %p66 = scmp.eq.s32.totalorder %s20, 0
      %p67 = por %p65, %p66
      %p68 = scmp.ne.s32.totalorder %s54, %s55
      %p69 = scmp.eq.s32.totalorder %s21, 1
      %p70 = por %p68, %p69
      %p72 = scmp.ne.s32.totalorder %s55, %s71
      %p73 = scmp.eq.s32.totalorder %s21, 0
      %p74 = por %p72, %p73
      %s75 = ssub.s32 %s15, %s22
      %p76 = scmp.eq.s32.totalorder %s75, 0
      %s78 = sadd.s32 %s77, 1
      %s79 = scalar_select %p76, %s77, %s78
      %p82 = pneg %p76
      %p83 = scmp.eq.s32.totalorder %s15, 1
      %p84 = por %p82, %p83
      %p85 = scmp.ne.s32.totalorder %s77, %s80
      %p86 = scmp.eq.s32.totalorder %s15, 0
      %p87 = por %p85, %p86
      %p88 = scmp.ne.s32.totalorder %s77, %s80
      %p89 = scmp.eq.s32.totalorder %s20, 1
      %p90 = por %p88, %p89
      %p91 = scmp.ne.s32.totalorder %s80, %s81
      %p92 = scmp.eq.s32.totalorder %s20, 0
      %p93 = por %p91, %p92
      %p94 = scmp.ne.s32.totalorder %s80, %s81
      %p95 = scmp.eq.s32.totalorder %s21, 1
      %p96 = por %p94, %p95
      %p98 = scmp.ne.s32.totalorder %s81, %s97
      %p99 = scmp.eq.s32.totalorder %s21, 0
      %p100 = por %p98, %p99
      %s102 = sadd.s32 %s101, 1
      %p105 = scmp.eq.s32.totalorder %s15, 1
      %p106 = scmp.ne.s32.totalorder %s101, %s103
      %p107 = scmp.eq.s32.totalorder %s15, 0
      %p108 = por %p106, %p107
      %p109 = scmp.ne.s32.totalorder %s101, %s103
      %p110 = scmp.eq.s32.totalorder %s20, 1
      %p111 = por %p109, %p110
      %p112 = scmp.ne.s32.totalorder %s103, %s104
      %p113 = scmp.eq.s32.totalorder %s20, 0
      %p114 = por %p112, %p113
      %p115 = scmp.ne.s32.totalorder %s103, %s104
      %p116 = scmp.eq.s32.totalorder %s21, 1
      %p117 = por %p115, %p116
      %p119 = scmp.ne.s32.totalorder %s104, %s118
      %p120 = scmp.eq.s32.totalorder %s21, 0
      %p121 = por %p119, %p120
      %s122 = ssub.s32 %s15, %s22
      %p123 = scmp.eq.s32.totalorder %s122, 0
      %s125 = sadd.s32 %s124, 1
      %s126 = scalar_select %p123, %s124, %s125
      %p129 = pneg %p123
      %p130 = scmp.eq.s32.totalorder %s15, 1
      %p131 = por %p129, %p130
      %p132 = scmp.ne.s32.totalorder %s124, %s127
      %p133 = scmp.eq.s32.totalorder %s15, 0
      %p134 = por %p132, %p133
      %p135 = scmp.ne.s32.totalorder %s124, %s127
      %p136 = scmp.eq.s32.totalorder %s20, 1
      %p137 = por %p135, %p136
      %p138 = scmp.ne.s32.totalorder %s127, %s128
      %p139 = scmp.eq.s32.totalorder %s20, 0
      %p140 = por %p138, %p139
      %p141 = scmp.ne.s32.totalorder %s127, %s128
      %p142 = scmp.eq.s32.totalorder %s21, 1
      %p143 = por %p141, %p142
      %p145 = scmp.ne.s32.totalorder %s128, %s144
      %p146 = scmp.eq.s32.totalorder %s21, 0
      %p147 = por %p145, %p146
      %s148 = ssub.s32 %s15, %s22
      %p149 = scmp.eq.s32.totalorder %s148, 0
      %s151 = sadd.s32 %s150, 1
      %s152 = scalar_select %p149, %s150, %s151
      %p155 = pneg %p149
      %p156 = scmp.eq.s32.totalorder %s15, 1
      %p157 = por %p155, %p156
      %p158 = scmp.ne.s32.totalorder %s150, %s153
      %p159 = scmp.eq.s32.totalorder %s15, 0
      %p160 = por %p158, %p159
      %p161 = scmp.ne.s32.totalorder %s150, %s153
      %p162 = scmp.eq.s32.totalorder %s20, 1
      %p163 = por %p161, %p162
      %p164 = scmp.ne.s32.totalorder %s153, %s154
      %p165 = scmp.eq.s32.totalorder %s20, 0
      %p166 = por %p164, %p165
      %p167 = scmp.ne.s32.totalorder %s153, %s154
      %p168 = scmp.eq.s32.totalorder %s21, 1
      %p169 = por %p167, %p168
      %p171 = scmp.ne.s32.totalorder %s154, %s170
      %p172 = scmp.eq.s32.totalorder %s21, 0
      %p173 = por %p171, %p172
      %s174 = ssub.s32 %s15, %s22
      %p175 = scmp.eq.s32.totalorder %s174, 0
      %s177 = sadd.s32 %s176, 1
      %s178 = scalar_select %p175, %s176, %s177
      %p181 = pneg %p175
      %p182 = scmp.eq.s32.totalorder %s15, 1
      %p183 = por %p181, %p182
      %p184 = scmp.ne.s32.totalorder %s176, %s179
      %p185 = scmp.eq.s32.totalorder %s15, 0
      %p186 = por %p184, %p185
      %p187 = scmp.ne.s32.totalorder %s176, %s179
      %p188 = scmp.eq.s32.totalorder %s20, 1
      %p189 = por %p187, %p188
      %p190 = scmp.ne.s32.totalorder %s179, %s180
      %p191 = scmp.eq.s32.totalorder %s20, 0
      %p192 = por %p190, %p191
      %p193 = scmp.ne.s32.totalorder %s179, %s180
      %p194 = scmp.eq.s32.totalorder %s21, 1
      %p195 = por %p193, %p194
      %p197 = scmp.ne.s32.totalorder %s180, %s196
      %p198 = scmp.eq.s32.totalorder %s21, 0
      %p199 = por %p197, %p198
      %p200 = scmp.le.s32.totalorder 1, %s15
      %p201 = scmp.lt.s32.totalorder %s15, 3
      %p202 = pnand %p200, %p201
      %p203 = pneg %p202
      // Predicated region
      $region9: #{tpu_custom_call.1} parent=5 // pred_check
        _
      $region10: #{tpu_custom_call.1} parent=5 // pred_check_branch
        %205 = sbr.rel (%p202) target = $region12
      $region11: #{tpu_custom_call.1} parent=5 // pred_region
        %s206 = ssub.s32 %s15, 1
        // Predicated region
        $region13: #{tpu_custom_call.1} parent=11 // pred_check
          %p207 = pneg %p114
        $region14: #{tpu_custom_call.1} parent=11 // pred_check_branch
          %209 = sbr.rel (%p207) target = $region16
        $region15: #{tpu_custom_call.1} parent=11 // pred_region
          _
        $region16: #{tpu_custom_call.1} parent=11 // pred_fallthru
          _
      $region12: #{tpu_custom_call.1} parent=5 // pred_fallthru
        _
      %p210 = scmp.lt.s32.totalorder %s15, 2
      // Predicated region
      $region17: #{tpu_custom_call.1} parent=5 // pred_check
        %p211 = pneg %p210
      $region18: #{tpu_custom_call.1} parent=5 // pred_check_branch
        %213 = sbr.rel (%p211) target = $region20
      $region19: #{tpu_custom_call.1} parent=5 // pred_region
        // Predicated region
        $region21: #{tpu_custom_call.1} parent=19 // pred_check
          %p214 = pneg %p35
        $region22: #{tpu_custom_call.1} parent=19 // pred_check_branch
          %216 = sbr.rel (%p214) target = $region24
        $region23: #{tpu_custom_call.1} parent=19 // pred_region
          %s217 = sand.u32 %s25, 1
          %s218 = scalar_lea.sflag [#allocation3], %s217
          %s219 = sand.u32 %s25, 1
          %s220 = smul.addr %s219, 32
          %s221 = scalar_lea.vmem [#allocation2], %s220
          %223 = vsyncadd %s218, 0
          %s224 = smul.addr %s15, 8
          %s225 = smul.addr %s224, 4
          %s226 = scalar_lea.hbm %s0, %s225
          %s227 = sshll.u32 %s226, 4
          %s228 = int_to_ptr.hbm [resolvable:$true] %s227
          %s229 = sshll.u32 %s221, 4
          %s230 = int_to_ptr.vmem [resolvable:$true] %s229
          %235 = dma.hbm_to_vmem [thread:$0]  %s228, 512, %s230, %s218, 128, 128, 8
        $region24: #{tpu_custom_call.1} parent=19 // pred_fallthru
          _
        // Predicated region
        $region25: #{tpu_custom_call.1} parent=19 // pred_check
          %p236 = pneg %p61
        $region26: #{tpu_custom_call.1} parent=19 // pred_check_branch
          %238 = sbr.rel (%p236) target = $region28
        $region27: #{tpu_custom_call.1} parent=19 // pred_region
          %p239 = scmp.lt.s32.totalorder %s15, 1
          %s240 = scalar_select %p239, %s15, 1
          %s241 = smul.addr %s240, 9
          %s242 = smul.addr %s241, 4
          %s243 = scalar_lea.vmem %s1, %s242
        $region28: #{tpu_custom_call.1} parent=19 // pred_fallthru
          _
        // Predicated region
        $region29: #{tpu_custom_call.1} parent=19 // pred_check
          %p244 = pneg %p87
        $region30: #{tpu_custom_call.1} parent=19 // pred_check_branch
          %246 = sbr.rel (%p244) target = $region32
        $region31: #{tpu_custom_call.1} parent=19 // pred_region
          %p247 = scmp.lt.s32.totalorder %s15, 1
          %s248 = scalar_select %p247, %s15, 1
          %s249 = smul.addr %s248, 3
          %s250 = smul.addr %s249, 8
          %s251 = scalar_lea.vmem %s2, %s250
        $region32: #{tpu_custom_call.1} parent=19 // pred_fallthru
          _
        // Predicated region
        $region33: #{tpu_custom_call.1} parent=19 // pred_check
          %p252 = pneg %p134
        $region34: #{tpu_custom_call.1} parent=19 // pred_check_branch
          %254 = sbr.rel (%p252) target = $region36
        $region35: #{tpu_custom_call.1} parent=19 // pred_region
          %p255 = scmp.lt.s32.totalorder %s15, 1
          %s256 = scalar_select %p255, %s15, 1
          %s257 = smul.addr %s256, 8
          %s258 = smul.addr %s257, 8
          %s259 = scalar_lea.vmem %s4, %s258
        $region36: #{tpu_custom_call.1} parent=19 // pred_fallthru
          _
        // Predicated region
        $region37: #{tpu_custom_call.1} parent=19 // pred_check
          %p260 = pneg %p160
        $region38: #{tpu_custom_call.1} parent=19 // pred_check_branch
          %262 = sbr.rel (%p260) target = $region40
        $region39: #{tpu_custom_call.1} parent=19 // pred_region
          %p263 = scmp.lt.s32.totalorder %s15, 1
          %s264 = scalar_select %p263, %s15, 1
          %s265 = smul.addr %s264, 2
          %s266 = smul.addr %s265, 8
          %s267 = scalar_lea.vmem %s5, %s266
        $region40: #{tpu_custom_call.1} parent=19 // pred_fallthru
          _
      $region20: #{tpu_custom_call.1} parent=5 // pred_fallthru
        _
      %p268 = scmp.le.s32.totalorder 1, %s15
      %p269 = scmp.lt.s32.totalorder %s15, 3
      %p270 = pnand %p268, %p269
      %p271 = pneg %p270
      // Predicated region
      $region41: #{tpu_custom_call.1} parent=5 // pred_check
        _
      $region42: #{tpu_custom_call.1} parent=5 // pred_check_branch
        %273 = sbr.rel (%p270) target = $region44
      $region43: #{tpu_custom_call.1} parent=5 // pred_region
        %s274 = ssub.s32 %s15, 1
        %s275 = sand.u32 %s28, 1
        %s276 = scalar_lea.sflag [#allocation3], %s275
        %s277 = sand.u32 %s28, 1
        %s278 = smul.addr %s277, 32
        %s279 = scalar_lea.vmem [#allocation2], %s278
        // Predicated region
        $region45: #{tpu_custom_call.1} parent=43 // pred_check
          %p280 = pneg %p41
        $region46: #{tpu_custom_call.1} parent=43 // pred_check_branch
          %282 = sbr.rel (%p280) target = $region48
        $region47: #{tpu_custom_call.1} parent=43 // pred_region
          %284 = dma.done %s276, 512
        $region48: #{tpu_custom_call.1} parent=43 // pred_fallthru
          _
        %s285 = sand.u32 %s28, 1
        %s286 = scalar_lea.sflag [#allocation3], %s285
        %s287 = sand.u32 %s28, 1
        %s288 = smul.addr %s287, 32
        %s289 = scalar_lea.vmem [#allocation2], %s288
        %p290 = pneg %p41
        %p291 = pneg %p38
        %p292 = scmp.lt.s32.totalorder %s20, 1
        %s293 = scalar_select %p292, %s20, 1
        %s294 = smul.addr %s293, 9
        %s295 = smul.addr %s294, 4
        %s296 = scalar_lea.vmem %s1, %s295
        %p297 = pneg %p67
        %p298 = pneg %p64
        %p299 = scmp.lt.s32.totalorder %s20, 1
        %s300 = scalar_select %p299, %s20, 1
        %s301 = smul.addr %s300, 3
        %s302 = smul.addr %s301, 8
        %s303 = scalar_lea.vmem %s2, %s302
        %p304 = pneg %p93
        %p305 = pneg %p90
        %p306 = pneg %p114
        %p307 = pneg %p111
        %p308 = scmp.lt.s32.totalorder %s20, 1
        %s309 = scalar_select %p308, %s20, 1
        %s310 = smul.addr %s309, 8
        %s311 = smul.addr %s310, 8
        %s312 = scalar_lea.vmem %s4, %s311
        %p313 = pneg %p140
        %p314 = pneg %p137
        %p315 = scmp.lt.s32.totalorder %s20, 1
        %s316 = scalar_select %p315, %s20, 1
        %s317 = smul.addr %s316, 2
        %s318 = smul.addr %s317, 8
        %s319 = scalar_lea.vmem %s5, %s318
        %p320 = pneg %p166
        %p321 = pneg %p163
        %p322 = pneg %p192
        %p323 = pneg %p189
        %p324 = scmp.lt.s32.totalorder %s20, 1
        %s325 = scalar_select %p324, %s20, 1
        %s326 = smul.addr %s325, 4
        %s327 = smul.addr %s326, 8
        %s328 = scalar_lea.vmem %s6, %s327
        %p329 = scmp.lt.s32.totalorder %s20, 1
        %s330 = scalar_select %p329, %s20, 1
        %s331 = smul.addr %s330, 9
        %s332 = smul.addr %s331, 4
        %s333 = scalar_lea.vmem %s1, %s332
        %p334 = scmp.lt.s32.totalorder %s20, 1
        %s335 = scalar_select %p334, %s20, 1
        %s336 = smul.addr %s335, 3
        %s337 = smul.addr %s336, 8
        %s338 = scalar_lea.vmem %s2, %s337
        %p339 = scmp.lt.s32.totalorder %s20, 1
        %s340 = scalar_select %p339, %s20, 1
        %s341 = smul.addr %s340, 8
        %s342 = smul.addr %s341, 8
        %s343 = scalar_lea.vmem %s4, %s342
        %p344 = scmp.lt.s32.totalorder %s20, 1
        %s345 = scalar_select %p344, %s20, 1
        %s346 = smul.addr %s345, 2
        %s347 = smul.addr %s346, 8
        %s348 = scalar_lea.vmem %s5, %s347
        %p349 = scmp.lt.s32.totalorder %s20, 1
        %s350 = scalar_select %p349, %s20, 1
        %s351 = smul.addr %s350, 4
        %s352 = smul.addr %s351, 8
        %s353 = scalar_lea.vmem %s6, %s352
        %v355 = vld [vmem:[%s279] sm:$0xff]
        %v356 = vld [vmem:[%s279 + $0x8] sm:$0xff]
        %v357 = vld [vmem:[%s279 + $0x10] sm:$0xff]
        %v358 = vld [vmem:[%s279 + $0x18] sm:$0xff]
        %v363 = vunpack.c.l.b16 %v355
        %v364 = vunpack.c.l.b16 %v356
        %v365 = vunpack.c.l.b16 %v357
        %v366 = vunpack.c.l.b16 %v358
        %v367 = vpack.c.b16 %v364, %v363
        %v368 = vpack.c.b16 %v366, %v365
        %v371 = vunpack.c.h.b16 %v355
        %v372 = vunpack.c.h.b16 %v356
        %v373 = vunpack.c.h.b16 %v357
        %v374 = vunpack.c.h.b16 %v358
        %v375 = vpack.c.b16 %v372, %v371
        %v376 = vpack.c.b16 %v374, %v373
        %377 = vrot.lane.b32.xlu0 %v367, 127
        %v378 = vpop.permute.xlu0 %377
        %379 = vrot.lane.b32.xlu0 %v375, 127
        %v380 = vpop.permute.xlu0 %379
        %381 = vrot.lane.b32.xlu0 %v368, 127
        %v382 = vpop.permute.xlu0 %381
        %383 = vrot.lane.b32.xlu0 %v376, 127
        %v384 = vpop.permute.xlu0 %383
        %vm385 = vcmask 1039360
        %v386 = vsel %vm385, %v378, %v380
        %v387 = vsel %vm385, %v382, %v384
        %390 = vrot.lane.b32.xlu0 %v367, 126
        %v391 = vpop.permute.xlu0 %390
        %392 = vrot.lane.b32.xlu0 %v375, 126
        %v393 = vpop.permute.xlu0 %392
        %394 = vrot.lane.b32.xlu0 %v368, 126
        %v395 = vpop.permute.xlu0 %394
        %396 = vrot.lane.b32.xlu0 %v376, 126
        %v397 = vpop.permute.xlu0 %396
        %vm398 = vcmask 1031168
        %v399 = vsel %vm398, %v391, %v393
        %v400 = vsel %vm398, %v395, %v397
        %403 = vrot.lane.b32.xlu0 %v367, 125
        %v404 = vpop.permute.xlu0 %403
        %405 = vrot.lane.b32.xlu0 %v375, 125
        %v406 = vpop.permute.xlu0 %405
        %407 = vrot.lane.b32.xlu0 %v368, 125
        %v408 = vpop.permute.xlu0 %407
        %409 = vrot.lane.b32.xlu0 %v376, 125
        %v410 = vpop.permute.xlu0 %409
        %vm411 = vcmask 1022976
        %v412 = vsel %vm411, %v404, %v406
        %v413 = vsel %vm411, %v408, %v410
        %416 = vrot.lane.b32.xlu0 %v367, 124
        %v417 = vpop.permute.xlu0 %416
        %418 = vrot.lane.b32.xlu0 %v375, 124
        %v419 = vpop.permute.xlu0 %418
        %420 = vrot.lane.b32.xlu0 %v368, 124
        %v421 = vpop.permute.xlu0 %420
        %422 = vrot.lane.b32.xlu0 %v376, 124
        %v423 = vpop.permute.xlu0 %422
        %vm424 = vcmask 1014784
        %v425 = vsel %vm424, %v417, %v419
        %v426 = vsel %vm424, %v421, %v423
        %429 = vrot.lane.b32.xlu0 %v367, 123
        %v430 = vpop.permute.xlu0 %429
        %431 = vrot.lane.b32.xlu0 %v375, 123
        %v432 = vpop.permute.xlu0 %431
        %433 = vrot.lane.b32.xlu0 %v368, 123
        %v434 = vpop.permute.xlu0 %433
        %435 = vrot.lane.b32.xlu0 %v376, 123
        %v436 = vpop.permute.xlu0 %435
        %vm437 = vcmask 1006592
        %v438 = vsel %vm437, %v430, %v432
        %v439 = vsel %vm437, %v434, %v436
        %442 = vrot.lane.b32.xlu0 %v367, 122
        %v443 = vpop.permute.xlu0 %442
        %444 = vrot.lane.b32.xlu0 %v375, 122
        %v445 = vpop.permute.xlu0 %444
        %446 = vrot.lane.b32.xlu0 %v368, 122
        %v447 = vpop.permute.xlu0 %446
        %448 = vrot.lane.b32.xlu0 %v376, 122
        %v449 = vpop.permute.xlu0 %448
        %vm450 = vcmask 998400
        %v451 = vsel %vm450, %v443, %v445
        %v452 = vsel %vm450, %v447, %v449
        %455 = vrot.lane.b32.xlu0 %v367, 121
        %v456 = vpop.permute.xlu0 %455
        %457 = vrot.lane.b32.xlu0 %v375, 121
        %v458 = vpop.permute.xlu0 %457
        %459 = vrot.lane.b32.xlu0 %v368, 121
        %v460 = vpop.permute.xlu0 %459
        %461 = vrot.lane.b32.xlu0 %v376, 121
        %v462 = vpop.permute.xlu0 %461
        %vm463 = vcmask 990208
        %v464 = vsel %vm463, %v456, %v458
        %v465 = vsel %vm463, %v460, %v462
        %468 = vrot.lane.b32.xlu0 %v367, 120
        %v469 = vpop.permute.xlu0 %468
        %470 = vrot.lane.b32.xlu0 %v375, 120
        %v471 = vpop.permute.xlu0 %470
        %472 = vrot.lane.b32.xlu0 %v368, 120
        %v473 = vpop.permute.xlu0 %472
        %474 = vrot.lane.b32.xlu0 %v376, 120
        %v475 = vpop.permute.xlu0 %474
        %vm476 = vcmask 982016
        %v477 = vsel %vm476, %v469, %v471
        %v478 = vsel %vm476, %v473, %v475
        %481 = vrot.lane.b32.xlu0 %v367, 119
        %v482 = vpop.permute.xlu0 %481
        %483 = vrot.lane.b32.xlu0 %v375, 119
        %v484 = vpop.permute.xlu0 %483
        %485 = vrot.lane.b32.xlu0 %v368, 119
        %v486 = vpop.permute.xlu0 %485
        %487 = vrot.lane.b32.xlu0 %v376, 119
        %v488 = vpop.permute.xlu0 %487
        %vm489 = vcmask 973824
        %v490 = vsel %vm489, %v482, %v484
        %v491 = vsel %vm489, %v486, %v488
        %494 = vrot.lane.b32.xlu0 %v367, 118
        %v495 = vpop.permute.xlu0 %494
        %496 = vrot.lane.b32.xlu0 %v375, 118
        %v497 = vpop.permute.xlu0 %496
        %498 = vrot.lane.b32.xlu0 %v368, 118
        %v499 = vpop.permute.xlu0 %498
        %500 = vrot.lane.b32.xlu0 %v376, 118
        %v501 = vpop.permute.xlu0 %500
        %vm502 = vcmask 965632
        %v503 = vsel %vm502, %v495, %v497
        %v504 = vsel %vm502, %v499, %v501
        %507 = vrot.lane.b32.xlu0 %v367, 117
        %v508 = vpop.permute.xlu0 %507
        %509 = vrot.lane.b32.xlu0 %v375, 117
        %v510 = vpop.permute.xlu0 %509
        %511 = vrot.lane.b32.xlu0 %v368, 117
        %v512 = vpop.permute.xlu0 %511
        %513 = vrot.lane.b32.xlu0 %v376, 117
        %v514 = vpop.permute.xlu0 %513
        %vm515 = vcmask 957440
        %v516 = vsel %vm515, %v508, %v510
        %v517 = vsel %vm515, %v512, %v514
        %520 = vrot.lane.b32.xlu0 %v367, 116
        %v521 = vpop.permute.xlu0 %520
        %522 = vrot.lane.b32.xlu0 %v375, 116
        %v523 = vpop.permute.xlu0 %522
        %524 = vrot.lane.b32.xlu0 %v368, 116
        %v525 = vpop.permute.xlu0 %524
        %526 = vrot.lane.b32.xlu0 %v376, 116
        %v527 = vpop.permute.xlu0 %526
        %vm528 = vcmask 949248
        %v529 = vsel %vm528, %v521, %v523
        %v530 = vsel %vm528, %v525, %v527
        %533 = vrot.lane.b32.xlu0 %v367, 115
        %v534 = vpop.permute.xlu0 %533
        %535 = vrot.lane.b32.xlu0 %v375, 115
        %v536 = vpop.permute.xlu0 %535
        %537 = vrot.lane.b32.xlu0 %v368, 115
        %v538 = vpop.permute.xlu0 %537
        %539 = vrot.lane.b32.xlu0 %v376, 115
        %v540 = vpop.permute.xlu0 %539
        %vm541 = vcmask 941056
        %v542 = vsel %vm541, %v534, %v536
        %v543 = vsel %vm541, %v538, %v540
        %546 = vrot.lane.b32.xlu0 %v367, 114
        %v547 = vpop.permute.xlu0 %546
        %548 = vrot.lane.b32.xlu0 %v375, 114
        %v549 = vpop.permute.xlu0 %548
        %550 = vrot.lane.b32.xlu0 %v368, 114
        %v551 = vpop.permute.xlu0 %550
        %552 = vrot.lane.b32.xlu0 %v376, 114
        %v553 = vpop.permute.xlu0 %552
        %vm554 = vcmask 932864
        %v555 = vsel %vm554, %v547, %v549
        %v556 = vsel %vm554, %v551, %v553
        %559 = vrot.lane.b32.xlu0 %v367, 113
        %v560 = vpop.permute.xlu0 %559
        %561 = vrot.lane.b32.xlu0 %v375, 113
        %v562 = vpop.permute.xlu0 %561
        %563 = vrot.lane.b32.xlu0 %v368, 113
        %v564 = vpop.permute.xlu0 %563
        %565 = vrot.lane.b32.xlu0 %v376, 113
        %v566 = vpop.permute.xlu0 %565
        %vm567 = vcmask 924672
        %v568 = vsel %vm567, %v560, %v562
        %v569 = vsel %vm567, %v564, %v566
        %572 = vrot.lane.b32.xlu0 %v367, 112
        %v573 = vpop.permute.xlu0 %572
        %574 = vrot.lane.b32.xlu0 %v375, 112
        %v575 = vpop.permute.xlu0 %574
        %576 = vrot.lane.b32.xlu0 %v386, 112
        %v577 = vpop.permute.xlu0 %576
        %578 = vrot.lane.b32.xlu0 %v380, 112
        %v579 = vpop.permute.xlu0 %578
        %580 = vrot.lane.b32.xlu0 %v399, 112
        %v581 = vpop.permute.xlu0 %580
        %582 = vrot.lane.b32.xlu0 %v393, 112
        %v583 = vpop.permute.xlu0 %582
        %584 = vrot.lane.b32.xlu0 %v412, 112
        %v585 = vpop.permute.xlu0 %584
        %586 = vrot.lane.b32.xlu0 %v406, 112
        %v587 = vpop.permute.xlu0 %586
        %588 = vrot.lane.b32.xlu0 %v368, 112
        %v589 = vpop.permute.xlu0 %588
        %590 = vrot.lane.b32.xlu0 %v376, 112
        %v591 = vpop.permute.xlu0 %590
        %592 = vrot.lane.b32.xlu0 %v387, 112
        %v593 = vpop.permute.xlu0 %592
        %594 = vrot.lane.b32.xlu0 %v384, 112
        %v595 = vpop.permute.xlu0 %594
        %596 = vrot.lane.b32.xlu0 %v400, 112
        %v597 = vpop.permute.xlu0 %596
        %598 = vrot.lane.b32.xlu0 %v397, 112
        %v599 = vpop.permute.xlu0 %598
        %600 = vrot.lane.b32.xlu0 %v413, 112
        %v601 = vpop.permute.xlu0 %600
        %602 = vrot.lane.b32.xlu0 %v410, 112
        %v603 = vpop.permute.xlu0 %602
        %vm604 = vcmask 916480
        %v605 = vsel %vm604, %v573, %v575
        %v606 = vsel %vm604, %v577, %v579
        %v607 = vsel %vm604, %v581, %v583
        %v608 = vsel %vm604, %v585, %v587
        %v609 = vsel %vm604, %v589, %v591
        %v610 = vsel %vm604, %v593, %v595
        %v611 = vsel %vm604, %v597, %v599
        %v612 = vsel %vm604, %v601, %v603
        %v621 = vld [vmem:[%s333] sm:$0xff]
        %v622 = vld [vmem:[%s333 + $0x8] sm:$0xf]
        %v623 = vld [vmem:[%s333 + $0xc] sm:$0xff]
        %v624 = vld [vmem:[%s333 + $0x14] sm:$0xf]
        %v625 = vld [vmem:[%s333 + $0x18] sm:$0x33]
        %v626 = vld [vmem:[%s333 + $0x20] sm:$0x3]
        %v627 = vld [vmem:[%s338] sm:$0xff]
        %v628 = vld [vmem:[%s338 + $0x8] sm:$0xff]
        %v629 = vld [vmem:[%s338 + $0x10] sm:$0xf]
        %631 = vset.pattern.permute.xlu0 0
        %632 = vperm.xlu0 %631, %v627
        %v633 = vpop.permute.xlu0 %632
        %636 = vset.pattern.permute.xlu0 0
        %637 = vperm.xlu0 %636, %v628
        %v638 = vpop.permute.xlu0 %637
        %641 = vset.pattern.permute.xlu0 0
        %642 = vperm.xlu0 %641, %v629
        %v643 = vpop.permute.xlu0 %642
        %v651 = vunpack.c.l.b16 %v621
        %v652 = vunpack.c.h.b16 %v621
        %v653 = vunpack.c.l.b16 %v622
        %v654 = vunpack.c.l.b16 %v623
        %v655 = vunpack.c.h.b16 %v623
        %v656 = vunpack.c.l.b16 %v624
        %v657 = vunpack.c.l.b16 %v625
        %v658 = vunpack.c.h.b16 %v625
        %v659 = vunpack.c.l.b16 %v626
        %v660 = vpack.c.b16 %v654, %v651
        %v661 = vpack.c.b16 %v655, %v652
        %v662 = vpack.c.b16 %v656, %v653
        %v663 = vpack.c.b16 %v657, %v657
        %v664 = vpack.c.b16 %v658, %v658
        %v665 = vpack.c.b16 %v659, %v659
        %vm670 = vcmask 523264
        %v672 = vsel %vm670, %v662, 0
        %v675 = vsel %vm670, %v665, 0
        %677 = vmatpush.bf16.msra.mxu0 %v464
        %678 = vmatpush.bf16.msra.mxu0 %v451
        %679 = vmatpush.bf16.msra.mxu0 %v438
        %680 = vmatpush.bf16.msra.mxu0 %v425
        %681 = vmatpush.bf16.msra.mxu0 %v412
        %682 = vmatpush.bf16.msra.mxu0 %v399
        %683 = vmatpush.bf16.msra.mxu0 %v386
        %684 = vmatpush.bf16.msra.mxu0 %v367
        %685 = vmatmul.bf16.gmra.mxu0 %v660
        %v686 = vpop.f32.mrf.mxu0
        %v687 = vadd.f32 %v633, %v686
        %v688 = vpop.f32.mrf.mxu0
        %v689 = vadd.f32 %v638, %v688
        %690 = vmatmul.bf16.gmra.mxu0 %v663
        %v691 = vpop.f32.mrf.mxu0
        %v692 = vadd.f32 %v643, %v691
        %v693 = vpop.f32.mrf.mxu0
        %694 = vdwg.mxu0
        %695 = vmatpush.bf16.msra.mxu0 %v568
        %696 = vmatpush.bf16.msra.mxu0 %v555
        %697 = vmatpush.bf16.msra.mxu0 %v542
        %698 = vmatpush.bf16.msra.mxu0 %v529
        %699 = vmatpush.bf16.msra.mxu0 %v516
        %700 = vmatpush.bf16.msra.mxu0 %v503
        %701 = vmatpush.bf16.msra.mxu0 %v490
        %702 = vmatpush.bf16.msra.mxu0 %v477
        %703 = vmatmul.bf16.gmra.mxu0 %v661
        %v704 = vpop.f32.mrf.mxu0
        %v705 = vadd.f32 %v687, %v704
        %v706 = vpop.f32.mrf.mxu0
        %v707 = vadd.f32 %v689, %v706
        %708 = vmatmul.bf16.gmra.mxu0 %v664
        %v709 = vpop.f32.mrf.mxu0
        %v710 = vadd.f32 %v692, %v709
        %v711 = vpop.f32.mrf.mxu0
        %712 = vdwg.mxu0
        %713 = vmatpush.bf16.msra.mxu0 0
        %714 = vmatpush.bf16.msra.mxu0 0
        %715 = vmatpush.bf16.msra.mxu0 0
        %716 = vmatpush.bf16.msra.mxu0 0
        %717 = vmatpush.bf16.msra.mxu0 %v608
        %718 = vmatpush.bf16.msra.mxu0 %v607
        %719 = vmatpush.bf16.msra.mxu0 %v606
        %720 = vmatpush.bf16.msra.mxu0 %v605
        %721 = vmatmul.bf16.gmra.mxu0 %v672
        %v722 = vpop.f32.mrf.mxu0
        %v723 = vadd.f32 %v705, %v722
        %v724 = vpop.f32.mrf.mxu0
        %v725 = vadd.f32 %v707, %v724
        %726 = vmatmul.bf16.gmra.mxu0 %v675
        %v727 = vpop.f32.mrf.mxu0
        %v728 = vadd.f32 %v710, %v727
        %v729 = vpop.f32.mrf.mxu0
        %730 = vdwg.mxu0
        %731 = vmatpush.bf16.msra.mxu0 %v465
        %732 = vmatpush.bf16.msra.mxu0 %v452
        %733 = vmatpush.bf16.msra.mxu0 %v439
        %734 = vmatpush.bf16.msra.mxu0 %v426
        %735 = vmatpush.bf16.msra.mxu0 %v413
        %736 = vmatpush.bf16.msra.mxu0 %v400
        %737 = vmatpush.bf16.msra.mxu0 %v387
        %738 = vmatpush.bf16.msra.mxu0 %v368
        %739 = vmatmul.bf16.gmra.mxu0 %v660
        %v740 = vpop.f32.mrf.mxu0
        %v741 = vadd.f32 %v633, %v740
        %v742 = vpop.f32.mrf.mxu0
        %v743 = vadd.f32 %v638, %v742
        %744 = vmatmul.bf16.gmra.mxu0 %v663
        %v745 = vpop.f32.mrf.mxu0
        %v746 = vadd.f32 %v643, %v745
        %v747 = vpop.f32.mrf.mxu0
        %748 = vdwg.mxu0
        %749 = vmatpush.bf16.msra.mxu0 %v569
        %750 = vmatpush.bf16.msra.mxu0 %v556
        %751 = vmatpush.bf16.msra.mxu0 %v543
        %752 = vmatpush.bf16.msra.mxu0 %v530
        %753 = vmatpush.bf16.msra.mxu0 %v517
        %754 = vmatpush.bf16.msra.mxu0 %v504
        %755 = vmatpush.bf16.msra.mxu0 %v491
        %756 = vmatpush.bf16.msra.mxu0 %v478
        %757 = vmatmul.bf16.gmra.mxu0 %v661
        %v758 = vpop.f32.mrf.mxu0
        %v759 = vadd.f32 %v741, %v758
        %v760 = vpop.f32.mrf.mxu0
        %v761 = vadd.f32 %v743, %v760
        %762 = vmatmul.bf16.gmra.mxu0 %v664
        %v763 = vpop.f32.mrf.mxu0
        %v764 = vadd.f32 %v746, %v763
        %v765 = vpop.f32.mrf.mxu0
        %766 = vdwg.mxu0
        %767 = vmatpush.bf16.msra.mxu0 0
        %768 = vmatpush.bf16.msra.mxu0 0
        %769 = vmatpush.bf16.msra.mxu0 0
        %770 = vmatpush.bf16.msra.mxu0 0
        %771 = vmatpush.bf16.msra.mxu0 %v612
        %772 = vmatpush.bf16.msra.mxu0 %v611
        %773 = vmatpush.bf16.msra.mxu0 %v610
        %774 = vmatpush.bf16.msra.mxu0 %v609
        %775 = vmatmul.bf16.gmra.mxu0 %v672
        %v776 = vpop.f32.mrf.mxu0
        %v777 = vadd.f32 %v759, %v776
        %v778 = vpop.f32.mrf.mxu0
        %v779 = vadd.f32 %v761, %v778
        %780 = vmatmul.bf16.gmra.mxu0 %v675
        %v781 = vpop.f32.mrf.mxu0
        %v782 = vadd.f32 %v764, %v781
        %v783 = vpop.f32.mrf.mxu0
        %784 = vdwg.mxu0
        %v785 = vmax.f32 %v723, 0.0
        %v786 = vmax.f32 %v725, 0.0
        %v787 = vmax.f32 %v728, 0.0
        %v788 = vmax.f32 %v777, 0.0
        %v789 = vmax.f32 %v779, 0.0
        %v790 = vmax.f32 %v782, 0.0
        %v791 = vld [vmem:[%s3] sm:$0xff]
        %v792 = vld [vmem:[%s3 + $0x8] sm:$0xff]
        %v793 = vld [vmem:[%s3 + $0x10] sm:$0xff]
        %v794 = vld [vmem:[%s3 + $0x18] sm:$0xff]
        %v795 = vld [vmem:[%s3 + $0x20] sm:$0xff]
        %v796 = vld [vmem:[%s3 + $0x28] sm:$0xff]
        %v797 = vld [vmem:[%s3 + $0x30] sm:$0xff]
        %v798 = vld [vmem:[%s3 + $0x38] sm:$0xff]
        %v799 = vld [vmem:[%s3 + $0x40] sm:$0xff]
        %v800 = vld [vmem:[%s3 + $0x48] sm:$0xff]
        %v801 = vld [vmem:[%s3 + $0x50] sm:$0xff]
        %v802 = vld [vmem:[%s3 + $0x58] sm:$0xff]
        %v803 = vld [vmem:[%s3 + $0x60] sm:$0xff]
        %v804 = vld [vmem:[%s3 + $0x68] sm:$0xff]
        %v805 = vld [vmem:[%s3 + $0x70] sm:$0xff]
        %v806 = vld [vmem:[%s3 + $0x78] sm:$0xff]
        %v807 = vld [vmem:[%s3 + $0x80] sm:$0xff]
        %v808 = vld [vmem:[%s3 + $0x88] sm:$0xff]
        %v809 = vld [vmem:[%s3 + $0x90] sm:$0xff]
        %v810 = vld [vmem:[%s3 + $0x98] sm:$0xff]
        %v811 = vld [vmem:[%s3 + $0xa0] sm:$0xff]
        %v812 = vld [vmem:[%s3 + $0xa8] sm:$0xff]
        %v813 = vld [vmem:[%s3 + $0xb0] sm:$0xff]
        %v814 = vld [vmem:[%s3 + $0xb8] sm:$0xff]
        %v815 = vld [vmem:[%s3 + $0xc0] sm:$0xff]
        %v816 = vld [vmem:[%s3 + $0xc8] sm:$0xff]
        %v817 = vld [vmem:[%s3 + $0xd0] sm:$0xff]
        %v818 = vld [vmem:[%s3 + $0xd8] sm:$0xff]
        %v819 = vld [vmem:[%s3 + $0xe0] sm:$0xff]
        %v820 = vld [vmem:[%s3 + $0xe8] sm:$0xff]
        %v821 = vld [vmem:[%s3 + $0xf0] sm:$0xff]
        %v822 = vld [vmem:[%s3 + $0xf8] sm:$0xff]
        %v823 = vpack.c.bf16 %v785, %v785
        %v824 = vpack.c.bf16 %v786, %v786
        %v825 = vpack.c.bf16 %v787, %v787
        %v826 = vpack.c.bf16 %v788, %v788
        %v827 = vpack.c.bf16 %v789, %v789
        %v828 = vpack.c.bf16 %v790, %v790
        %v832 = vunpack.c.l.b16 %v823
        %v833 = vunpack.c.l.b16 %v824
        %v834 = vunpack.c.l.b16 %v825
        %v835 = vpack.c.b16 %v833, %v832
        %v836 = vpack.c.b16 %v834, %v834
        %v871 = vunpack.c.l.b16 %v791
        %v872 = vunpack.c.h.b16 %v791
        %v873 = vunpack.c.l.b16 %v792
        %v874 = vunpack.c.h.b16 %v792
        %v875 = vunpack.c.l.b16 %v793
        %v876 = vunpack.c.h.b16 %v793
        %v877 = vunpack.c.l.b16 %v794
        %v878 = vunpack.c.h.b16 %v794
        %v879 = vunpack.c.l.b16 %v795
        %v880 = vunpack.c.h.b16 %v795
        %v881 = vunpack.c.l.b16 %v796
        %v882 = vunpack.c.h.b16 %v796
        %v883 = vunpack.c.l.b16 %v797
        %v884 = vunpack.c.h.b16 %v797
        %v885 = vunpack.c.l.b16 %v798
        %v886 = vunpack.c.h.b16 %v798
        %v887 = vunpack.c.l.b16 %v799
        %v888 = vunpack.c.h.b16 %v799
        %v889 = vunpack.c.l.b16 %v800
        %v890 = vunpack.c.h.b16 %v800
        %v891 = vunpack.c.l.b16 %v801
        %v892 = vunpack.c.h.b16 %v801
        %v893 = vunpack.c.l.b16 %v802
        %v894 = vunpack.c.h.b16 %v802
        %v895 = vunpack.c.l.b16 %v803
        %v896 = vunpack.c.h.b16 %v803
        %v897 = vunpack.c.l.b16 %v804
        %v898 = vunpack.c.h.b16 %v804
        %v899 = vunpack.c.l.b16 %v805
        %v900 = vunpack.c.h.b16 %v805
        %v901 = vunpack.c.l.b16 %v806
        %v902 = vunpack.c.h.b16 %v806
        %v903 = vunpack.c.l.b16 %v807
        %v904 = vunpack.c.h.b16 %v807
        %v905 = vunpack.c.l.b16 %v808
        %v906 = vunpack.c.h.b16 %v808
        %v907 = vunpack.c.l.b16 %v809
        %v908 = vunpack.c.h.b16 %v809
        %v909 = vunpack.c.l.b16 %v810
        %v910 = vunpack.c.h.b16 %v810
        %v911 = vunpack.c.l.b16 %v811
        %v912 = vunpack.c.h.b16 %v811
        %v913 = vunpack.c.l.b16 %v812
        %v914 = vunpack.c.h.b16 %v812
        %v915 = vunpack.c.l.b16 %v813
        %v916 = vunpack.c.h.b16 %v813
        %v917 = vunpack.c.l.b16 %v814
        %v918 = vunpack.c.h.b16 %v814
        %v919 = vunpack.c.l.b16 %v815
        %v920 = vunpack.c.h.b16 %v815
        %v921 = vunpack.c.l.b16 %v816
        %v922 = vunpack.c.h.b16 %v816
        %v923 = vunpack.c.l.b16 %v817
        %v924 = vunpack.c.h.b16 %v817
        %v925 = vunpack.c.l.b16 %v818
        %v926 = vunpack.c.h.b16 %v818
        %v927 = vunpack.c.l.b16 %v819
        %v928 = vunpack.c.h.b16 %v819
        %v929 = vunpack.c.l.b16 %v820
        %v930 = vunpack.c.h.b16 %v820
        %v931 = vunpack.c.l.b16 %v821
        %v932 = vunpack.c.h.b16 %v821
        %v933 = vunpack.c.l.b16 %v822
        %v934 = vunpack.c.h.b16 %v822
        %v935 = vpack.c.b16 %v875, %v871
        %v936 = vpack.c.b16 %v876, %v872
        %v937 = vpack.c.b16 %v877, %v873
        %v938 = vpack.c.b16 %v878, %v874
        %v939 = vpack.c.b16 %v883, %v879
        %v940 = vpack.c.b16 %v884, %v880
        %v941 = vpack.c.b16 %v885, %v881
        %v942 = vpack.c.b16 %v886, %v882
        %v943 = vpack.c.b16 %v891, %v887
        %v944 = vpack.c.b16 %v892, %v888
        %v945 = vpack.c.b16 %v893, %v889
        %v946 = vpack.c.b16 %v894, %v890
        %v947 = vpack.c.b16 %v899, %v895
        %v948 = vpack.c.b16 %v900, %v896
        %v949 = vpack.c.b16 %v901, %v897
        %v950 = vpack.c.b16 %v902, %v898
        %v951 = vpack.c.b16 %v907, %v903
        %v952 = vpack.c.b16 %v908, %v904
        %v953 = vpack.c.b16 %v909, %v905
        %v954 = vpack.c.b16 %v910, %v906
        %v955 = vpack.c.b16 %v915, %v911
        %v956 = vpack.c.b16 %v916, %v912
        %v957 = vpack.c.b16 %v917, %v913
        %v958 = vpack.c.b16 %v918, %v914
        %v959 = vpack.c.b16 %v923, %v919
        %v960 = vpack.c.b16 %v924, %v920
        %v961 = vpack.c.b16 %v925, %v921
        %v962 = vpack.c.b16 %v926, %v922
        %v963 = vpack.c.b16 %v931, %v927
        %v964 = vpack.c.b16 %v932, %v928
        %v965 = vpack.c.b16 %v933, %v929
        %v966 = vpack.c.b16 %v934, %v930
        %999 = vmatpush.bf16.msra.mxu0 %v963
        %1000 = vmatpush.bf16.msra.mxu0 %v959
        %1001 = vmatpush.bf16.msra.mxu0 %v955
        %1002 = vmatpush.bf16.msra.mxu0 %v951
        %1003 = vmatpush.bf16.msra.mxu0 %v947
        %1004 = vmatpush.bf16.msra.mxu0 %v943
        %1005 = vmatpush.bf16.msra.mxu0 %v939
        %1006 = vmatpush.bf16.msra.mxu0 %v935
        %1007 = vmatmul.bf16.gmra.mxu0 %v835
        %v1008 = vpop.f32.mrf.mxu0
        %v1009 = vadd.f32 0.0, %v1008
        %v1010 = vpop.f32.mrf.mxu0
        %v1011 = vadd.f32 0.0, %v1010
        %1012 = vmatmul.bf16.gmra.mxu0 %v836
        %v1013 = vpop.f32.mrf.mxu0
        %v1014 = vadd.f32 0.0, %v1013
        %v1015 = vpop.f32.mrf.mxu0
        %1016 = vdwg.mxu0
        %1017 = vmatpush.bf16.msra.mxu0 %v964
        %1018 = vmatpush.bf16.msra.mxu0 %v960
        %1019 = vmatpush.bf16.msra.mxu0 %v956
        %1020 = vmatpush.bf16.msra.mxu0 %v952
        %1021 = vmatpush.bf16.msra.mxu0 %v948
        %1022 = vmatpush.bf16.msra.mxu0 %v944
        %1023 = vmatpush.bf16.msra.mxu0 %v940
        %1024 = vmatpush.bf16.msra.mxu0 %v936
        %1025 = vmatmul.bf16.gmra.mxu0 %v835
        %v1026 = vpop.f32.mrf.mxu0
        %v1027 = vadd.f32 0.0, %v1026
        %v1028 = vpop.f32.mrf.mxu0
        %v1029 = vadd.f32 0.0, %v1028
        %1030 = vmatmul.bf16.gmra.mxu0 %v836
        %v1031 = vpop.f32.mrf.mxu0
        %v1032 = vadd.f32 0.0, %v1031
        %v1033 = vpop.f32.mrf.mxu0
        %1034 = vdwg.mxu0
        %1035 = vmatpush.bf16.msra.mxu0 %v965
        %1036 = vmatpush.bf16.msra.mxu0 %v961
        %1037 = vmatpush.bf16.msra.mxu0 %v957
        %1038 = vmatpush.bf16.msra.mxu0 %v953
        %1039 = vmatpush.bf16.msra.mxu0 %v949
        %1040 = vmatpush.bf16.msra.mxu0 %v945
        %1041 = vmatpush.bf16.msra.mxu0 %v941
        %1042 = vmatpush.bf16.msra.mxu0 %v937
        %1043 = vmatmul.bf16.gmra.mxu0 %v835
        %v1044 = vpop.f32.mrf.mxu0
        %v1045 = vadd.f32 0.0, %v1044
        %v1046 = vpop.f32.mrf.mxu0
        %v1047 = vadd.f32 0.0, %v1046
        %1048 = vmatmul.bf16.gmra.mxu0 %v836
        %v1049 = vpop.f32.mrf.mxu0
        %v1050 = vadd.f32 0.0, %v1049
        %v1051 = vpop.f32.mrf.mxu0
        %1052 = vdwg.mxu0
        %1053 = vmatpush.bf16.msra.mxu0 %v966
        %1054 = vmatpush.bf16.msra.mxu0 %v962
        %1055 = vmatpush.bf16.msra.mxu0 %v958
        %1056 = vmatpush.bf16.msra.mxu0 %v954
        %1057 = vmatpush.bf16.msra.mxu0 %v950
        %1058 = vmatpush.bf16.msra.mxu0 %v946
        %1059 = vmatpush.bf16.msra.mxu0 %v942
        %1060 = vmatpush.bf16.msra.mxu0 %v938
        %1061 = vmatmul.bf16.gmra.mxu0 %v835
        %v1062 = vpop.f32.mrf.mxu0
        %v1063 = vadd.f32 0.0, %v1062
        %v1064 = vpop.f32.mrf.mxu0
        %v1065 = vadd.f32 0.0, %v1064
        %1066 = vmatmul.bf16.gmra.mxu0 %v836
        %v1067 = vpop.f32.mrf.mxu0
        %v1068 = vadd.f32 0.0, %v1067
        %v1069 = vpop.f32.mrf.mxu0
        %1070 = vdwg.mxu0
        %v1074 = vunpack.c.l.b16 %v826
        %v1075 = vunpack.c.l.b16 %v827
        %v1076 = vunpack.c.l.b16 %v828
        %v1077 = vpack.c.b16 %v1075, %v1074
        %v1078 = vpack.c.b16 %v1076, %v1076
        %1081 = vmatpush.bf16.msra.mxu0 %v963
        %1082 = vmatpush.bf16.msra.mxu0 %v959
        %1083 = vmatpush.bf16.msra.mxu0 %v955
        %1084 = vmatpush.bf16.msra.mxu0 %v951
        %1085 = vmatpush.bf16.msra.mxu0 %v947
        %1086 = vmatpush.bf16.msra.mxu0 %v943
        %1087 = vmatpush.bf16.msra.mxu0 %v939
        %1088 = vmatpush.bf16.msra.mxu0 %v935
        %1089 = vmatmul.bf16.gmra.mxu0 %v1077
        %v1090 = vpop.f32.mrf.mxu0
        %v1091 = vadd.f32 0.0, %v1090
        %v1092 = vpop.f32.mrf.mxu0
        %v1093 = vadd.f32 0.0, %v1092
        %1094 = vmatmul.bf16.gmra.mxu0 %v1078
        %v1095 = vpop.f32.mrf.mxu0
        %v1096 = vadd.f32 0.0, %v1095
        %v1097 = vpop.f32.mrf.mxu0
        %1098 = vdwg.mxu0
        %1099 = vmatpush.bf16.msra.mxu0 %v964
        %1100 = vmatpush.bf16.msra.mxu0 %v960
        %1101 = vmatpush.bf16.msra.mxu0 %v956
        %1102 = vmatpush.bf16.msra.mxu0 %v952
        %1103 = vmatpush.bf16.msra.mxu0 %v948
        %1104 = vmatpush.bf16.msra.mxu0 %v944
        %1105 = vmatpush.bf16.msra.mxu0 %v940
        %1106 = vmatpush.bf16.msra.mxu0 %v936
        %1107 = vmatmul.bf16.gmra.mxu0 %v1077
        %v1108 = vpop.f32.mrf.mxu0
        %v1109 = vadd.f32 0.0, %v1108
        %v1110 = vpop.f32.mrf.mxu0
        %v1111 = vadd.f32 0.0, %v1110
        %1112 = vmatmul.bf16.gmra.mxu0 %v1078
        %v1113 = vpop.f32.mrf.mxu0
        %v1114 = vadd.f32 0.0, %v1113
        %v1115 = vpop.f32.mrf.mxu0
        %1116 = vdwg.mxu0
        %1117 = vmatpush.bf16.msra.mxu0 %v965
        %1118 = vmatpush.bf16.msra.mxu0 %v961
        %1119 = vmatpush.bf16.msra.mxu0 %v957
        %1120 = vmatpush.bf16.msra.mxu0 %v953
        %1121 = vmatpush.bf16.msra.mxu0 %v949
        %1122 = vmatpush.bf16.msra.mxu0 %v945
        %1123 = vmatpush.bf16.msra.mxu0 %v941
        %1124 = vmatpush.bf16.msra.mxu0 %v937
        %1125 = vmatmul.bf16.gmra.mxu0 %v1077
        %v1126 = vpop.f32.mrf.mxu0
        %v1127 = vadd.f32 0.0, %v1126
        %v1128 = vpop.f32.mrf.mxu0
        %v1129 = vadd.f32 0.0, %v1128
        %1130 = vmatmul.bf16.gmra.mxu0 %v1078
        %v1131 = vpop.f32.mrf.mxu0
        %v1132 = vadd.f32 0.0, %v1131
        %v1133 = vpop.f32.mrf.mxu0
        %1134 = vdwg.mxu0
        %1135 = vmatpush.bf16.msra.mxu0 %v966
        %1136 = vmatpush.bf16.msra.mxu0 %v962
        %1137 = vmatpush.bf16.msra.mxu0 %v958
        %1138 = vmatpush.bf16.msra.mxu0 %v954
        %1139 = vmatpush.bf16.msra.mxu0 %v950
        %1140 = vmatpush.bf16.msra.mxu0 %v946
        %1141 = vmatpush.bf16.msra.mxu0 %v942
        %1142 = vmatpush.bf16.msra.mxu0 %v938
        %1143 = vmatmul.bf16.gmra.mxu0 %v1077
        %v1144 = vpop.f32.mrf.mxu0
        %v1145 = vadd.f32 0.0, %v1144
        %v1146 = vpop.f32.mrf.mxu0
        %v1147 = vadd.f32 0.0, %v1146
        %1148 = vmatmul.bf16.gmra.mxu0 %v1078
        %v1149 = vpop.f32.mrf.mxu0
        %v1150 = vadd.f32 0.0, %v1149
        %v1151 = vpop.f32.mrf.mxu0
        %1152 = vdwg.mxu0
        %v1153 = vld [vmem:[%s343] sm:$0xff]
        %v1154 = vld [vmem:[%s343 + $0x8] sm:$0x3]
        %s1155 = scalar_lea.vmem %s343, 16
        %v1156 = vld [vmem:[%s1155] sm:$0xff]
        %v1157 = vld [vmem:[%s1155 + $0x8] sm:$0x3]
        %vm1158 = vcmask 162816
        %v1160 = vsel %vm1158, %v1156, 0
        %v1163 = vsel %vm1158, %v1157, 0
        %vm1165 = vcmask 1043456
        %v1167 = vsel %vm1165, %v1032, 0
        %1169 = vmatpush.msra.mxu0 0.0
        %1170 = vmatpush.msra.mxu0 0.0
        %1171 = vmatpush.msra.mxu0 0.0
        %1172 = vmatpush.msra.mxu0 0.0
        %1173 = vmatpush.msra.mxu0 0.0
        %1174 = vmatpush.msra.mxu0 0.0
        %1175 = vmatpush.msra.mxu0 0.0
        %1176 = vmatpush.msra.mxu0 0.0
        %1177 = vmatpush.msra.mxu0 0.0
        %1178 = vmatpush.msra.mxu0 0.0
        %1179 = vmatpush.msra.mxu0 0.0
        %1180 = vmatpush.msra.mxu0 0.0
        %1181 = vmatpush.msra.mxu0 0.0
        %1182 = vmatpush.msra.mxu0 %v1167
        %1183 = vmatpush.msra.mxu0 %v1029
        %1184 = vmatpush.msra.mxu0 %v1027
        %1185 = vmatmul.f32.gmra.mxu0 %v1160
        %v1186 = vpop.f32.mrf.mxu0
        %v1187 = vadd.f32 0.0, %v1186
        %1188 = vmatmul.f32.gmra.mxu0 %v1163
        %v1189 = vpop.f32.mrf.mxu0
        %v1190 = vadd.f32 0.0, %v1189
        %1191 = vdwg.mxu0
        %v1193 = vsel %vm1165, %v1114, 0
        %1195 = vmatpush.msra.mxu0 0.0
        %1196 = vmatpush.msra.mxu0 0.0
        %1197 = vmatpush.msra.mxu0 0.0
        %1198 = vmatpush.msra.mxu0 0.0
        %1199 = vmatpush.msra.mxu0 0.0
        %1200 = vmatpush.msra.mxu0 0.0
        %1201 = vmatpush.msra.mxu0 0.0
        %1202 = vmatpush.msra.mxu0 0.0
        %1203 = vmatpush.msra.mxu0 0.0
        %1204 = vmatpush.msra.mxu0 0.0
        %1205 = vmatpush.msra.mxu0 0.0
        %1206 = vmatpush.msra.mxu0 0.0
        %1207 = vmatpush.msra.mxu0 0.0
        %1208 = vmatpush.msra.mxu0 %v1193
        %1209 = vmatpush.msra.mxu0 %v1111
        %1210 = vmatpush.msra.mxu0 %v1109
        %1211 = vmatmul.f32.gmra.mxu0 %v1160
        %v1212 = vpop.f32.mrf.mxu0
        %v1213 = vadd.f32 0.0, %v1212
        %1214 = vmatmul.f32.gmra.mxu0 %v1163
        %v1215 = vpop.f32.mrf.mxu0
        %v1216 = vadd.f32 0.0, %v1215
        %1217 = vdwg.mxu0
        %v1219 = vsel %vm1158, %v1153, 0
        %v1222 = vsel %vm1158, %v1154, 0
        %v1225 = vsel %vm1165, %v1014, 0
        %1227 = vmatpush.msra.mxu0 0.0
        %1228 = vmatpush.msra.mxu0 0.0
        %1229 = vmatpush.msra.mxu0 0.0
        %1230 = vmatpush.msra.mxu0 0.0
        %1231 = vmatpush.msra.mxu0 0.0
        %1232 = vmatpush.msra.mxu0 0.0
        %1233 = vmatpush.msra.mxu0 0.0
        %1234 = vmatpush.msra.mxu0 0.0
        %1235 = vmatpush.msra.mxu0 0.0
        %1236 = vmatpush.msra.mxu0 0.0
        %1237 = vmatpush.msra.mxu0 0.0
        %1238 = vmatpush.msra.mxu0 0.0
        %1239 = vmatpush.msra.mxu0 0.0
        %1240 = vmatpush.msra.mxu0 %v1225
        %1241 = vmatpush.msra.mxu0 %v1011
        %1242 = vmatpush.msra.mxu0 %v1009
        %1243 = vmatmul.f32.gmra.mxu0 %v1219
        %v1244 = vpop.f32.mrf.mxu0
        %v1245 = vadd.f32 %v1187, %v1244
        %1246 = vmatmul.f32.gmra.mxu0 %v1222
        %v1247 = vpop.f32.mrf.mxu0
        %v1248 = vadd.f32 %v1190, %v1247
        %1249 = vdwg.mxu0
        %v1251 = vsel %vm1165, %v1096, 0
        %1253 = vmatpush.msra.mxu0 0.0
        %1254 = vmatpush.msra.mxu0 0.0
        %1255 = vmatpush.msra.mxu0 0.0
        %1256 = vmatpush.msra.mxu0 0.0
        %1257 = vmatpush.msra.mxu0 0.0
        %1258 = vmatpush.msra.mxu0 0.0
        %1259 = vmatpush.msra.mxu0 0.0
        %1260 = vmatpush.msra.mxu0 0.0
        %1261 = vmatpush.msra.mxu0 0.0
        %1262 = vmatpush.msra.mxu0 0.0
        %1263 = vmatpush.msra.mxu0 0.0
        %1264 = vmatpush.msra.mxu0 0.0
        %1265 = vmatpush.msra.mxu0 0.0
        %1266 = vmatpush.msra.mxu0 %v1251
        %1267 = vmatpush.msra.mxu0 %v1093
        %1268 = vmatpush.msra.mxu0 %v1091
        %1269 = vmatmul.f32.gmra.mxu0 %v1219
        %v1270 = vpop.f32.mrf.mxu0
        %v1271 = vadd.f32 %v1213, %v1270
        %1272 = vmatmul.f32.gmra.mxu0 %v1222
        %v1273 = vpop.f32.mrf.mxu0
        %v1274 = vadd.f32 %v1216, %v1273
        %1275 = vdwg.mxu0
        %s1276 = scalar_lea.vmem %s343, 32
        %v1277 = vld [vmem:[%s1276] sm:$0xff]
        %v1278 = vld [vmem:[%s1276 + $0x8] sm:$0x3]
        %v1280 = vsel %vm1158, %v1277, 0
        %v1283 = vsel %vm1158, %v1278, 0
        %v1286 = vsel %vm1165, %v1050, 0
        %1288 = vmatpush.msra.mxu0 0.0
        %1289 = vmatpush.msra.mxu0 0.0
        %1290 = vmatpush.msra.mxu0 0.0
        %1291 = vmatpush.msra.mxu0 0.0
        %1292 = vmatpush.msra.mxu0 0.0
        %1293 = vmatpush.msra.mxu0 0.0
        %1294 = vmatpush.msra.mxu0 0.0
        %1295 = vmatpush.msra.mxu0 0.0
        %1296 = vmatpush.msra.mxu0 0.0
        %1297 = vmatpush.msra.mxu0 0.0
        %1298 = vmatpush.msra.mxu0 0.0
        %1299 = vmatpush.msra.mxu0 0.0
        %1300 = vmatpush.msra.mxu0 0.0
        %1301 = vmatpush.msra.mxu0 %v1286
        %1302 = vmatpush.msra.mxu0 %v1047
        %1303 = vmatpush.msra.mxu0 %v1045
        %1304 = vmatmul.f32.gmra.mxu0 %v1280
        %v1305 = vpop.f32.mrf.mxu0
        %v1306 = vadd.f32 0.0, %v1305
        %1307 = vmatmul.f32.gmra.mxu0 %v1283
        %v1308 = vpop.f32.mrf.mxu0
        %v1309 = vadd.f32 0.0, %v1308
        %1310 = vdwg.mxu0
        %v1312 = vsel %vm1165, %v1132, 0
        %1314 = vmatpush.msra.mxu0 0.0
        %1315 = vmatpush.msra.mxu0 0.0
        %1316 = vmatpush.msra.mxu0 0.0
        %1317 = vmatpush.msra.mxu0 0.0
        %1318 = vmatpush.msra.mxu0 0.0
        %1319 = vmatpush.msra.mxu0 0.0
        %1320 = vmatpush.msra.mxu0 0.0
        %1321 = vmatpush.msra.mxu0 0.0
        %1322 = vmatpush.msra.mxu0 0.0
        %1323 = vmatpush.msra.mxu0 0.0
        %1324 = vmatpush.msra.mxu0 0.0
        %1325 = vmatpush.msra.mxu0 0.0
        %1326 = vmatpush.msra.mxu0 0.0
        %1327 = vmatpush.msra.mxu0 %v1312
        %1328 = vmatpush.msra.mxu0 %v1129
        %1329 = vmatpush.msra.mxu0 %v1127
        %1330 = vmatmul.f32.gmra.mxu0 %v1280
        %v1331 = vpop.f32.mrf.mxu0
        %v1332 = vadd.f32 0.0, %v1331
        %1333 = vmatmul.f32.gmra.mxu0 %v1283
        %v1334 = vpop.f32.mrf.mxu0
        %v1335 = vadd.f32 0.0, %v1334
        %1336 = vdwg.mxu0
        %v1337 = vadd.f32 %v1245, %v1306
        %v1338 = vadd.f32 %v1248, %v1309
        %v1339 = vadd.f32 %v1271, %v1332
        %v1340 = vadd.f32 %v1274, %v1335
        %s1341 = scalar_lea.vmem %s343, 48
        %v1342 = vld [vmem:[%s1341] sm:$0xff]
        %v1343 = vld [vmem:[%s1341 + $0x8] sm:$0x3]
        %v1345 = vsel %vm1158, %v1342, 0
        %v1348 = vsel %vm1158, %v1343, 0
        %v1351 = vsel %vm1165, %v1068, 0
        %1353 = vmatpush.msra.mxu0 0.0
        %1354 = vmatpush.msra.mxu0 0.0
        %1355 = vmatpush.msra.mxu0 0.0
        %1356 = vmatpush.msra.mxu0 0.0
        %1357 = vmatpush.msra.mxu0 0.0
        %1358 = vmatpush.msra.mxu0 0.0
        %1359 = vmatpush.msra.mxu0 0.0
        %1360 = vmatpush.msra.mxu0 0.0
        %1361 = vmatpush.msra.mxu0 0.0
        %1362 = vmatpush.msra.mxu0 0.0
        %1363 = vmatpush.msra.mxu0 0.0
        %1364 = vmatpush.msra.mxu0 0.0
        %1365 = vmatpush.msra.mxu0 0.0
        %1366 = vmatpush.msra.mxu0 %v1351
        %1367 = vmatpush.msra.mxu0 %v1065
        %1368 = vmatpush.msra.mxu0 %v1063
        %1369 = vmatmul.f32.gmra.mxu0 %v1345
        %v1370 = vpop.f32.mrf.mxu0
        %v1371 = vadd.f32 0.0, %v1370
        %1372 = vmatmul.f32.gmra.mxu0 %v1348
        %v1373 = vpop.f32.mrf.mxu0
        %v1374 = vadd.f32 0.0, %v1373
        %1375 = vdwg.mxu0
        %v1377 = vsel %vm1165, %v1150, 0
        %1379 = vmatpush.msra.mxu0 0.0
        %1380 = vmatpush.msra.mxu0 0.0
        %1381 = vmatpush.msra.mxu0 0.0
        %1382 = vmatpush.msra.mxu0 0.0
        %1383 = vmatpush.msra.mxu0 0.0
        %1384 = vmatpush.msra.mxu0 0.0
        %1385 = vmatpush.msra.mxu0 0.0
        %1386 = vmatpush.msra.mxu0 0.0
        %1387 = vmatpush.msra.mxu0 0.0
        %1388 = vmatpush.msra.mxu0 0.0
        %1389 = vmatpush.msra.mxu0 0.0
        %1390 = vmatpush.msra.mxu0 0.0
        %1391 = vmatpush.msra.mxu0 0.0
        %1392 = vmatpush.msra.mxu0 %v1377
        %1393 = vmatpush.msra.mxu0 %v1147
        %1394 = vmatpush.msra.mxu0 %v1145
        %1395 = vmatmul.f32.gmra.mxu0 %v1345
        %v1396 = vpop.f32.mrf.mxu0
        %v1397 = vadd.f32 0.0, %v1396
        %1398 = vmatmul.f32.gmra.mxu0 %v1348
        %v1399 = vpop.f32.mrf.mxu0
        %v1400 = vadd.f32 0.0, %v1399
        %1401 = vdwg.mxu0
        %v1402 = vadd.f32 %v1337, %v1371
        %v1403 = vadd.f32 %v1338, %v1374
        %v1404 = vadd.f32 %v1339, %v1397
        %v1405 = vadd.f32 %v1340, %v1400
        %v1406 = vld [vmem:[%s348] sm:$0xff]
        %v1407 = vld [vmem:[%s348 + $0x8] sm:$0x3]
        %1409 = vset.pattern.permute.xlu0 0
        %1410 = vperm.xlu0 %1409, %v1406
        %v1411 = vpop.permute.xlu0 %1410
        %1414 = vset.pattern.permute.xlu0 0
        %1415 = vperm.xlu0 %1414, %v1407
        %v1416 = vpop.permute.xlu0 %1415
        %v1418 = vadd.f32 %v1402, %v1411
        %v1419 = vadd.f32 %v1403, %v1416
        %v1420 = vadd.f32 %v1404, %v1411
        %v1421 = vadd.f32 %v1405, %v1416
        %1422 = vst [vmem:[%s353] sm:$0xff] %v1418
        %1423 = vst [vmem:[%s353 + $0x8] sm:$0x3] %v1419
        %1424 = vst [vmem:[%s353 + $0x10] sm:$0xff] %v1420
        %1425 = vst [vmem:[%s353 + $0x18] sm:$0x3] %v1421
        %p1426 = scmp.lt.s32.totalorder %s20, 1
        %s1427 = scalar_select %p1426, %s20, 1
        %s1428 = smul.addr %s1427, 4
        %s1429 = smul.addr %s1428, 8
        %s1430 = scalar_lea.vmem %s6, %s1429
        // Predicated region
        $region49: #{tpu_custom_call.1} parent=43 // pred_check
          %p1431 = pneg %p189
        $region50: #{tpu_custom_call.1} parent=43 // pred_check_branch
          %1433 = sbr.rel (%p1431) target = $region52
        $region51: #{tpu_custom_call.1} parent=43 // pred_region
          _
        $region52: #{tpu_custom_call.1} parent=43 // pred_fallthru
          _
      $region44: #{tpu_custom_call.1} parent=5 // pred_fallthru
        _
      %p1434 = scmp.le.s32.totalorder 2, %s15
      // Predicated region
      $region53: #{tpu_custom_call.1} parent=5 // pred_check
        %p1435 = pneg %p1434
      $region54: #{tpu_custom_call.1} parent=5 // pred_check_branch
        %1437 = sbr.rel (%p1435) target = $region56
      $region55: #{tpu_custom_call.1} parent=5 // pred_region
        %s1438 = ssub.s32 %s15, 2
        // Predicated region
        $region57: #{tpu_custom_call.1} parent=55 // pred_check
          %p1439 = pneg %p195
        $region58: #{tpu_custom_call.1} parent=55 // pred_check_branch
          %1441 = sbr.rel (%p1439) target = $region60
        $region59: #{tpu_custom_call.1} parent=55 // pred_region
          %p1442 = scmp.lt.s32.totalorder %s21, 1
          %s1443 = scalar_select %p1442, %s21, 1
          %s1444 = smul.addr %s1443, 4
          %s1445 = smul.addr %s1444, 8
          %s1446 = scalar_lea.vmem %s6, %s1445
        $region60: #{tpu_custom_call.1} parent=55 // pred_fallthru
          _
      $region56: #{tpu_custom_call.1} parent=5 // pred_fallthru
        _
    $region6: #{tpu_custom_call.1} parent=1 // loop_footer
      %s19 = sadd.s32 1, %s15
    $region7: #{tpu_custom_call.1} parent=1 // loop_footer_branch
      %14 = sbr.rel target = $region3
    $region8: #{tpu_custom_call.1} parent=1 // loop_exit
      _
    %1447 = vsyncpa [#allocation3], 1
    %s1448 = scalar_lea.sflag [#allocation3], 1
    %1449 = vsyncpa %s1448, 1

</llo_original>
